<compile_context>
chip_gen: v5e
topology: v5e:2x2
jax: 0.10.0
libtpu: 0.0.40
codegen_flags: <defaults>
</compile_context>

<pallas_src>
import jax
import jax.numpy as jnp
from jax.experimental import pallas as pl
from jax.experimental.pallas import tpu as pltpu

_EPS = 1e-5


def resblock_forward(x, w1, b1, w2, b2, w3, b3):
    """x: (B, Cin, H, W). w1: (C,Cin,1,1) b1:(C,) w2:(C,C,3,3) b2:(C,)
    w3: (4C,C,1,1) b3:(4C,). Returns (B, 4C, H, W) with 4C == Cin."""
    B, Cin, H, W = x.shape
    C = w1.shape[0]
    C4 = w3.shape[0]
    assert C4 == Cin, "identity residual requires in_channels == channels * expansion"
    HW = H * W
    inv_hw = 1.0 / HW

    x_flat = x.reshape(B, Cin, HW)
    w1_2d = w1.reshape(C, Cin)
    w3_2d = w3.reshape(C4, C)
    b3_c = b3.reshape(C4, 1)
    # b1 / b2 are cancelled exactly by the InstanceNorm that follows them -> dead work.
    del b1, b2
    # tap-major 3x3 weights: w2_taps[kh*3 + kw] == w2[:, :, kh, kw]  (C_out, C_in)
    w2_taps = jnp.transpose(w2, (2, 3, 0, 1)).reshape(9, C, C)

    # 0/1 border masks (top, bottom, left, right) over the flattened H*W axis.
    yy, xx = jnp.meshgrid(jnp.arange(H), jnp.arange(W), indexing="ij")
    border = jnp.stack([yy == 0, yy == H - 1, xx == 0, xx == W - 1])
    border = border.reshape(4, HW).astype(jnp.float32)

    def _in_relu(t):
        # One-pass per-channel instance norm over the lane (spatial) axis, then ReLU.
        s = jnp.sum(t, axis=-1, keepdims=True)
        s2 = jnp.sum(t * t, axis=-1, keepdims=True)
        mu = s * inv_hw
        var = s2 * inv_hw - mu * mu
        return jnp.maximum((t - mu) * jax.lax.rsqrt(var + _EPS), 0.0)

    def kernel(x_ref, border_ref, w1_ref, w2_ref, w3_ref, b3_ref, o_ref):
        # x_ref: (1, Cin, HW)   border_ref: (4, HW)   w1_ref: (C, Cin)
        # w2_ref: (9, C, C)     w3_ref: (C4, C)       b3_ref: (C4, 1)
        # o_ref: (1, C4, HW)
        xb = x_ref[0]                                   # (Cin, HW), also the residual
        m = border_ref[...]                             # (4, HW) 0/1 masks
        m_top, m_bot = m[0:1, :], m[1:2, :]
        m_lft, m_rgt = m[2:3, :], m[3:4, :]

        # ---- IN + ReLU -> 1x1 conv (Cin -> C) -> IN + ReLU -------------------
        h = _in_relu(xb)
        h = jnp.dot(w1_ref[...], h, preferred_element_type=jnp.float32)
        h = _in_relu(h)

        # ---- reflection-padded 3x3 conv as 9 shifted-view MXU matmuls --------
        def shifted(t, amt, refl_mask):
            # Flat position p: t[p + amt] in the interior, t[p - amt] (reflected
            # pixel) where refl_mask == 1.  Shifts are tiny static rolls; the
            # masks keep the reflection per-row / per-column correct.
            fwd = jnp.roll(t, -amt, axis=1)
            bwd = jnp.roll(t, amt, axis=1)
            return refl_mask * bwd + (1.0 - refl_mask) * fwd

        acc = None
        for dh in (-1, 0, 1):
            if dh == 0:
                r = h
            elif dh < 0:
                r = shifted(h, -W, m_top)
            else:
                r = shifted(h, W, m_bot)
            for dw in (-1, 0, 1):
                if dw == 0:
                    t = r
                elif dw < 0:
                    t = shifted(r, -1, m_lft)
                else:
                    t = shifted(r, 1, m_rgt)
                k = (dh + 1) * 3 + (dw + 1)
                part = jnp.dot(w2_ref[k], t, preferred_element_type=jnp.float32)
                acc = part if acc is None else acc + part

        # ---- IN + ReLU -> 1x1 conv (C -> 4C) + b3 -> + residual ---------------
        h = _in_relu(acc)
        h = jnp.dot(w3_ref[...], h, preferred_element_type=jnp.float32)
        h = h + b3_ref[...]
        o_ref[0] = (h + xb).astype(o_ref.dtype)

    out_flat = pl.pallas_call(
        kernel,
        out_shape=jax.ShapeDtypeStruct((B, C4, HW), x.dtype),
        grid_spec=pltpu.PrefetchScalarGridSpec(
            num_scalar_prefetch=0,
            grid=(B,),
            in_specs=[
                pl.BlockSpec((1, Cin, HW), lambda b: (b, 0, 0)),   # x[b] / residual
                pl.BlockSpec((4, HW), lambda b: (0, 0)),           # border masks (resident)
                pl.BlockSpec((C, Cin), lambda b: (0, 0)),          # W1 (resident)
                pl.BlockSpec((9, C, C), lambda b: (0, 0, 0)),      # W2 taps (resident)
                pl.BlockSpec((C4, C), lambda b: (0, 0)),           # W3 (resident)
                pl.BlockSpec((C4, 1), lambda b: (0, 0)),           # b3 (resident)
            ],
            out_specs=pl.BlockSpec((1, C4, HW), lambda b: (b, 0, 0)),
        ),
        compiler_params=pltpu.CompilerParams(
            dimension_semantics=("parallel",),
            vmem_limit_bytes=32 * 1024 * 1024,
        ),
    )(x_flat, border, w1_2d, w2_taps, w3_2d, b3_c)

    return out_flat.reshape(B, C4, H, W)


# --------------------------- pure-JAX reference ---------------------------
def _ref_instance_norm(t, eps=_EPS):
    mu = t.mean(axis=(2, 3), keepdims=True)
    var = jnp.square(t - mu).mean(axis=(2, 3), keepdims=True)
    return (t - mu) / jnp.sqrt(var + eps)


def resblock_ref(x, w1, b1, w2, b2, w3, b3):
    h = jax.nn.relu(_ref_instance_norm(x))
    h = jnp.einsum("oi,bihw->bohw", w1[:, :, 0, 0], h) + b1[None, :, None, None]
    h = jax.nn.relu(_ref_instance_norm(h))
    hp = jnp.pad(h, ((0, 0), (0, 0), (1, 1), (1, 1)), mode="reflect")
    h = jax.lax.conv_general_dilated(
        hp, w2, window_strides=(1, 1), padding="VALID",
        dimension_numbers=("NCHW", "OIHW", "NCHW"))
    h = h + b2[None, :, None, None]
    h = jax.nn.relu(_ref_instance_norm(h))
    h = jnp.einsum("oi,bihw->bohw", w3[:, :, 0, 0], h) + b3[None, :, None, None]
    return h + x


if __name__ == "__main__":
    B = 2
    channels = 4                 # bottleneck width
    expansion = 4
    Cin = channels * expansion   # 16, so the identity residual path is valid
    C4 = channels * expansion
    H = W = 16

    key = jax.random.PRNGKey(0)
    ks = jax.random.split(key, 7)
    x = jax.random.normal(ks[0], (B, Cin, H, W), jnp.float32)
    w1 = 0.1 * jax.random.normal(ks[1], (channels, Cin, 1, 1), jnp.float32)
    b1 = 0.1 * jax.random.normal(ks[2], (channels,), jnp.float32)
    w2 = 0.1 * jax.random.normal(ks[3], (channels, channels, 3, 3), jnp.float32)
    b2 = 0.1 * jax.random.normal(ks[4], (channels,), jnp.float32)
    w3 = 0.1 * jax.random.normal(ks[5], (C4, channels, 1, 1), jnp.float32)
    b3 = 0.1 * jax.random.normal(ks[6], (C4,), jnp.float32)

    out = resblock_forward(x, w1, b1, w2, b2, w3, b3)
    out = jax.block_until_ready(out)

    ref = resblock_ref(x, w1, b1, w2, b2, w3, b3)
    assert out.shape == ref.shape
    assert jnp.allclose(out, ref, atol=1e-4, rtol=1e-4), (
        float(jnp.max(jnp.abs(out - ref))))

    print("KERNEL_OK")
</pallas_src>

<mosaic_0001>
module attributes {stable_mosaic.version = 11 : i64} {
  func.func @kernel(%arg0: i32, %arg1: memref<1x16x256xf32, #tpu.memory_space<vmem>>, %arg2: memref<4x256xf32, #tpu.memory_space<vmem>>, %arg3: memref<4x16xf32, #tpu.memory_space<vmem>>, %arg4: memref<9x4x4xf32, #tpu.memory_space<vmem>>, %arg5: memref<16x4xf32, #tpu.memory_space<vmem>>, %arg6: memref<16x1xf32, #tpu.memory_space<vmem>>, %arg7: memref<1x16x256xf32, #tpu.memory_space<vmem>>) attributes {dimension_semantics = [#tpu.dimension_semantics<parallel>], iteration_bounds = array<i64: 2>, scalar_prefetch = 0 : i64, scratch_operands = 0 : i64, tpu.core_type = #tpu.core_type<tc>, window_params = [{transform_indices = @transform_0, window_bounds = array<i64: 1, 16, 256>}, {pipeline_mode = #tpu.pipeline_mode<synchronous>, transform_indices = @transform_1, window_bounds = array<i64: 4, 256>}, {pipeline_mode = #tpu.pipeline_mode<synchronous>, transform_indices = @transform_2, window_bounds = array<i64: 4, 16>}, {pipeline_mode = #tpu.pipeline_mode<synchronous>, transform_indices = @transform_3, window_bounds = array<i64: 9, 4, 4>}, {pipeline_mode = #tpu.pipeline_mode<synchronous>, transform_indices = @transform_4, window_bounds = array<i64: 16, 4>}, {pipeline_mode = #tpu.pipeline_mode<synchronous>, transform_indices = @transform_5, window_bounds = array<i64: 16, 1>}, {transform_indices = @transform_6, window_bounds = array<i64: 1, 16, 256>}]} {
    %c0 = arith.constant 0 : index
    %c0_0 = arith.constant 0 : index
    %c0_1 = arith.constant 0 : index
    %0 = vector.load %arg1[%c0, %c0_0, %c0_1] : memref<1x16x256xf32, #tpu.memory_space<vmem>>, vector<1x16x256xf32>
    %1 = vector.shape_cast %0 : vector<1x16x256xf32> to vector<16x256xf32>
    %c0_2 = arith.constant 0 : index
    %c0_3 = arith.constant 0 : index
    %2 = vector.load %arg2[%c0_2, %c0_3] : memref<4x256xf32, #tpu.memory_space<vmem>>, vector<4x256xf32>
    %3 = vector.extract_strided_slice %2 {offsets = [0, 0], sizes = [1, 256], strides = [1, 1]} : vector<4x256xf32> to vector<1x256xf32>
    %4 = vector.extract_strided_slice %2 {offsets = [1, 0], sizes = [1, 256], strides = [1, 1]} : vector<4x256xf32> to vector<1x256xf32>
    %5 = vector.extract_strided_slice %2 {offsets = [2, 0], sizes = [1, 256], strides = [1, 1]} : vector<4x256xf32> to vector<1x256xf32>
    %6 = vector.extract_strided_slice %2 {offsets = [3, 0], sizes = [1, 256], strides = [1, 1]} : vector<4x256xf32> to vector<1x256xf32>
    %cst = arith.constant dense<0.000000e+00> : vector<16xf32>
    %7 = vector.multi_reduction <add>, %1, %cst [1] : vector<16x256xf32> to vector<16xf32>
    %8 = vector.shape_cast %7 : vector<16xf32> to vector<16x1xf32>
    %9 = arith.mulf %1, %1 : vector<16x256xf32>
    %cst_4 = arith.constant dense<0.000000e+00> : vector<16xf32>
    %10 = vector.multi_reduction <add>, %9, %cst_4 [1] : vector<16x256xf32> to vector<16xf32>
    %11 = vector.shape_cast %10 : vector<16xf32> to vector<16x1xf32>
    %cst_5 = arith.constant 3.906250e-03 : f32
    %12 = vector.broadcast %cst_5 : f32 to vector<16x1xf32>
    %13 = arith.mulf %8, %12 : vector<16x1xf32>
    %cst_6 = arith.constant 3.906250e-03 : f32
    %14 = vector.broadcast %cst_6 : f32 to vector<16x1xf32>
    %15 = arith.mulf %11, %14 : vector<16x1xf32>
    %16 = arith.mulf %13, %13 : vector<16x1xf32>
    %17 = arith.subf %15, %16 : vector<16x1xf32>
    %18 = vector.broadcast %13 : vector<16x1xf32> to vector<16x256xf32>
    %19 = arith.subf %1, %18 : vector<16x256xf32>
    %cst_7 = arith.constant 9.99999974E-6 : f32
    %20 = vector.broadcast %cst_7 : f32 to vector<16x1xf32>
    %21 = arith.addf %17, %20 : vector<16x1xf32>
    %22 = math.rsqrt %21 : vector<16x1xf32>
    %23 = vector.broadcast %22 : vector<16x1xf32> to vector<16x256xf32>
    %24 = arith.mulf %19, %23 : vector<16x256xf32>
    %cst_8 = arith.constant 0.000000e+00 : f32
    %25 = vector.broadcast %cst_8 : f32 to vector<16x256xf32>
    %26 = arith.maximumf %24, %25 : vector<16x256xf32>
    %c0_9 = arith.constant 0 : index
    %c0_10 = arith.constant 0 : index
    %27 = vector.load %arg3[%c0_9, %c0_10] : memref<4x16xf32, #tpu.memory_space<vmem>>, vector<4x16xf32>
    %cst_11 = arith.constant dense<0.000000e+00> : vector<4x256xf32>
    %28 = tpu.matmul %27, %26, %cst_11 {dimension_numbers = #tpu.dot_dimension_numbers<[1], [0], [0], [1], [0, 0, 1, 1], [], []>} : vector<4x16xf32>, vector<16x256xf32>, vector<4x256xf32> -> vector<4x256xf32>
    %cst_12 = arith.constant dense<0.000000e+00> : vector<4xf32>
    %29 = vector.multi_reduction <add>, %28, %cst_12 [1] : vector<4x256xf32> to vector<4xf32>
    %30 = vector.shape_cast %29 : vector<4xf32> to vector<4x1xf32>
    %31 = arith.mulf %28, %28 : vector<4x256xf32>
    %cst_13 = arith.constant dense<0.000000e+00> : vector<4xf32>
    %32 = vector.multi_reduction <add>, %31, %cst_13 [1] : vector<4x256xf32> to vector<4xf32>
    %33 = vector.shape_cast %32 : vector<4xf32> to vector<4x1xf32>
    %cst_14 = arith.constant 3.906250e-03 : f32
    %34 = vector.broadcast %cst_14 : f32 to vector<4x1xf32>
    %35 = arith.mulf %30, %34 : vector<4x1xf32>
    %cst_15 = arith.constant 3.906250e-03 : f32
    %36 = vector.broadcast %cst_15 : f32 to vector<4x1xf32>
    %37 = arith.mulf %33, %36 : vector<4x1xf32>
    %38 = arith.mulf %35, %35 : vector<4x1xf32>
    %39 = arith.subf %37, %38 : vector<4x1xf32>
    %40 = vector.broadcast %35 : vector<4x1xf32> to vector<4x256xf32>
    %41 = arith.subf %28, %40 : vector<4x256xf32>
    %cst_16 = arith.constant 9.99999974E-6 : f32
    %42 = vector.broadcast %cst_16 : f32 to vector<4x1xf32>
    %43 = arith.addf %39, %42 : vector<4x1xf32>
    %44 = math.rsqrt %43 : vector<4x1xf32>
    %45 = vector.broadcast %44 : vector<4x1xf32> to vector<4x256xf32>
    %46 = arith.mulf %41, %45 : vector<4x256xf32>
    %cst_17 = arith.constant 0.000000e+00 : f32
    %47 = vector.broadcast %cst_17 : f32 to vector<4x256xf32>
    %48 = arith.maximumf %46, %47 : vector<4x256xf32>
    %49 = vector.extract_strided_slice %48 {offsets = [0, 240], sizes = [4, 16], strides = [1, 1]} : vector<4x256xf32> to vector<4x16xf32>
    %50 = vector.extract_strided_slice %48 {offsets = [0, 0], sizes = [4, 240], strides = [1, 1]} : vector<4x256xf32> to vector<4x240xf32>
    %51 = tpu.concatenate %49, %50 in 1 : vector<4x16xf32>, vector<4x240xf32> -> vector<4x256xf32>
    %52 = vector.extract_strided_slice %48 {offsets = [0, 16], sizes = [4, 240], strides = [1, 1]} : vector<4x256xf32> to vector<4x240xf32>
    %53 = vector.extract_strided_slice %48 {offsets = [0, 0], sizes = [4, 16], strides = [1, 1]} : vector<4x256xf32> to vector<4x16xf32>
    %54 = tpu.concatenate %52, %53 in 1 : vector<4x240xf32>, vector<4x16xf32> -> vector<4x256xf32>
    %55 = vector.broadcast %3 : vector<1x256xf32> to vector<4x256xf32>
    %56 = arith.mulf %55, %54 : vector<4x256xf32>
    %cst_18 = arith.constant 1.000000e+00 : f32
    %57 = vector.broadcast %cst_18 : f32 to vector<1x256xf32>
    %58 = arith.subf %57, %3 : vector<1x256xf32>
    %59 = vector.broadcast %58 : vector<1x256xf32> to vector<4x256xf32>
    %60 = arith.mulf %59, %51 : vector<4x256xf32>
    %61 = arith.addf %56, %60 : vector<4x256xf32>
    %62 = vector.extract_strided_slice %61 {offsets = [0, 255], sizes = [4, 1], strides = [1, 1]} : vector<4x256xf32> to vector<4x1xf32>
    %63 = vector.extract_strided_slice %61 {offsets = [0, 0], sizes = [4, 255], strides = [1, 1]} : vector<4x256xf32> to vector<4x255xf32>
    %64 = tpu.concatenate %62, %63 in 1 : vector<4x1xf32>, vector<4x255xf32> -> vector<4x256xf32>
    %65 = vector.extract_strided_slice %61 {offsets = [0, 1], sizes = [4, 255], strides = [1, 1]} : vector<4x256xf32> to vector<4x255xf32>
    %66 = vector.extract_strided_slice %61 {offsets = [0, 0], sizes = [4, 1], strides = [1, 1]} : vector<4x256xf32> to vector<4x1xf32>
    %67 = tpu.concatenate %65, %66 in 1 : vector<4x255xf32>, vector<4x1xf32> -> vector<4x256xf32>
    %68 = vector.broadcast %5 : vector<1x256xf32> to vector<4x256xf32>
    %69 = arith.mulf %68, %67 : vector<4x256xf32>
    %cst_19 = arith.constant 1.000000e+00 : f32
    %70 = vector.broadcast %cst_19 : f32 to vector<1x256xf32>
    %71 = arith.subf %70, %5 : vector<1x256xf32>
    %72 = vector.broadcast %71 : vector<1x256xf32> to vector<4x256xf32>
    %73 = arith.mulf %72, %64 : vector<4x256xf32>
    %74 = arith.addf %69, %73 : vector<4x256xf32>
    %c0_20 = arith.constant 0 : index
    %c0_21 = arith.constant 0 : index
    %c0_22 = arith.constant 0 : index
    %75 = vector.load %arg4[%c0_20, %c0_21, %c0_22] : memref<9x4x4xf32, #tpu.memory_space<vmem>>, vector<1x4x4xf32>
    %76 = vector.shape_cast %75 : vector<1x4x4xf32> to vector<4x4xf32>
    %cst_23 = arith.constant dense<0.000000e+00> : vector<4x256xf32>
    %77 = tpu.matmul %76, %74, %cst_23 {dimension_numbers = #tpu.dot_dimension_numbers<[1], [0], [0], [1], [0, 0, 1, 1], [], []>} : vector<4x4xf32>, vector<4x256xf32>, vector<4x256xf32> -> vector<4x256xf32>
    %c1 = arith.constant 1 : index
    %c0_24 = arith.constant 0 : index
    %c0_25 = arith.constant 0 : index
    %78 = vector.load %arg4[%c1, %c0_24, %c0_25] : memref<9x4x4xf32, #tpu.memory_space<vmem>>, vector<1x4x4xf32>
    %79 = vector.shape_cast %78 : vector<1x4x4xf32> to vector<4x4xf32>
    %cst_26 = arith.constant dense<0.000000e+00> : vector<4x256xf32>
    %80 = tpu.matmul %79, %61, %cst_26 {dimension_numbers = #tpu.dot_dimension_numbers<[1], [0], [0], [1], [0, 0, 1, 1], [], []>} : vector<4x4xf32>, vector<4x256xf32>, vector<4x256xf32> -> vector<4x256xf32>
    %81 = arith.addf %77, %80 : vector<4x256xf32>
    %82 = vector.extract_strided_slice %61 {offsets = [0, 1], sizes = [4, 255], strides = [1, 1]} : vector<4x256xf32> to vector<4x255xf32>
    %83 = vector.extract_strided_slice %61 {offsets = [0, 0], sizes = [4, 1], strides = [1, 1]} : vector<4x256xf32> to vector<4x1xf32>
    %84 = tpu.concatenate %82, %83 in 1 : vector<4x255xf32>, vector<4x1xf32> -> vector<4x256xf32>
    %85 = vector.extract_strided_slice %61 {offsets = [0, 255], sizes = [4, 1], strides = [1, 1]} : vector<4x256xf32> to vector<4x1xf32>
    %86 = vector.extract_strided_slice %61 {offsets = [0, 0], sizes = [4, 255], strides = [1, 1]} : vector<4x256xf32> to vector<4x255xf32>
    %87 = tpu.concatenate %85, %86 in 1 : vector<4x1xf32>, vector<4x255xf32> -> vector<4x256xf32>
    %88 = vector.broadcast %6 : vector<1x256xf32> to vector<4x256xf32>
    %89 = arith.mulf %88, %87 : vector<4x256xf32>
    %cst_27 = arith.constant 1.000000e+00 : f32
    %90 = vector.broadcast %cst_27 : f32 to vector<1x256xf32>
    %91 = arith.subf %90, %6 : vector<1x256xf32>
    %92 = vector.broadcast %91 : vector<1x256xf32> to vector<4x256xf32>
    %93 = arith.mulf %92, %84 : vector<4x256xf32>
    %94 = arith.addf %89, %93 : vector<4x256xf32>
    %c2 = arith.constant 2 : index
    %c0_28 = arith.constant 0 : index
    %c0_29 = arith.constant 0 : index
    %95 = vector.load %arg4[%c2, %c0_28, %c0_29] : memref<9x4x4xf32, #tpu.memory_space<vmem>>, vector<1x4x4xf32>
    %96 = vector.shape_cast %95 : vector<1x4x4xf32> to vector<4x4xf32>
    %cst_30 = arith.constant dense<0.000000e+00> : vector<4x256xf32>
    %97 = tpu.matmul %96, %94, %cst_30 {dimension_numbers = #tpu.dot_dimension_numbers<[1], [0], [0], [1], [0, 0, 1, 1], [], []>} : vector<4x4xf32>, vector<4x256xf32>, vector<4x256xf32> -> vector<4x256xf32>
    %98 = arith.addf %81, %97 : vector<4x256xf32>
    %99 = vector.extract_strided_slice %48 {offsets = [0, 255], sizes = [4, 1], strides = [1, 1]} : vector<4x256xf32> to vector<4x1xf32>
    %100 = vector.extract_strided_slice %48 {offsets = [0, 0], sizes = [4, 255], strides = [1, 1]} : vector<4x256xf32> to vector<4x255xf32>
    %101 = tpu.concatenate %99, %100 in 1 : vector<4x1xf32>, vector<4x255xf32> -> vector<4x256xf32>
    %102 = vector.extract_strided_slice %48 {offsets = [0, 1], sizes = [4, 255], strides = [1, 1]} : vector<4x256xf32> to vector<4x255xf32>
    %103 = vector.extract_strided_slice %48 {offsets = [0, 0], sizes = [4, 1], strides = [1, 1]} : vector<4x256xf32> to vector<4x1xf32>
    %104 = tpu.concatenate %102, %103 in 1 : vector<4x255xf32>, vector<4x1xf32> -> vector<4x256xf32>
    %105 = vector.broadcast %5 : vector<1x256xf32> to vector<4x256xf32>
    %106 = arith.mulf %105, %104 : vector<4x256xf32>
    %cst_31 = arith.constant 1.000000e+00 : f32
    %107 = vector.broadcast %cst_31 : f32 to vector<1x256xf32>
    %108 = arith.subf %107, %5 : vector<1x256xf32>
    %109 = vector.broadcast %108 : vector<1x256xf32> to vector<4x256xf32>
    %110 = arith.mulf %109, %101 : vector<4x256xf32>
    %111 = arith.addf %106, %110 : vector<4x256xf32>
    %c3 = arith.constant 3 : index
    %c0_32 = arith.constant 0 : index
    %c0_33 = arith.constant 0 : index
    %112 = vector.load %arg4[%c3, %c0_32, %c0_33] : memref<9x4x4xf32, #tpu.memory_space<vmem>>, vector<1x4x4xf32>
    %113 = vector.shape_cast %112 : vector<1x4x4xf32> to vector<4x4xf32>
    %cst_34 = arith.constant dense<0.000000e+00> : vector<4x256xf32>
    %114 = tpu.matmul %113, %111, %cst_34 {dimension_numbers = #tpu.dot_dimension_numbers<[1], [0], [0], [1], [0, 0, 1, 1], [], []>} : vector<4x4xf32>, vector<4x256xf32>, vector<4x256xf32> -> vector<4x256xf32>
    %115 = arith.addf %98, %114 : vector<4x256xf32>
    %c4 = arith.constant 4 : index
    %c0_35 = arith.constant 0 : index
    %c0_36 = arith.constant 0 : index
    %116 = vector.load %arg4[%c4, %c0_35, %c0_36] : memref<9x4x4xf32, #tpu.memory_space<vmem>>, vector<1x4x4xf32>
    %117 = vector.shape_cast %116 : vector<1x4x4xf32> to vector<4x4xf32>
    %cst_37 = arith.constant dense<0.000000e+00> : vector<4x256xf32>
    %118 = tpu.matmul %117, %48, %cst_37 {dimension_numbers = #tpu.dot_dimension_numbers<[1], [0], [0], [1], [0, 0, 1, 1], [], []>} : vector<4x4xf32>, vector<4x256xf32>, vector<4x256xf32> -> vector<4x256xf32>
    %119 = arith.addf %115, %118 : vector<4x256xf32>
    %120 = vector.extract_strided_slice %48 {offsets = [0, 1], sizes = [4, 255], strides = [1, 1]} : vector<4x256xf32> to vector<4x255xf32>
    %121 = vector.extract_strided_slice %48 {offsets = [0, 0], sizes = [4, 1], strides = [1, 1]} : vector<4x256xf32> to vector<4x1xf32>
    %122 = tpu.concatenate %120, %121 in 1 : vector<4x255xf32>, vector<4x1xf32> -> vector<4x256xf32>
    %123 = vector.extract_strided_slice %48 {offsets = [0, 255], sizes = [4, 1], strides = [1, 1]} : vector<4x256xf32> to vector<4x1xf32>
    %124 = vector.extract_strided_slice %48 {offsets = [0, 0], sizes = [4, 255], strides = [1, 1]} : vector<4x256xf32> to vector<4x255xf32>
    %125 = tpu.concatenate %123, %124 in 1 : vector<4x1xf32>, vector<4x255xf32> -> vector<4x256xf32>
    %126 = vector.broadcast %6 : vector<1x256xf32> to vector<4x256xf32>
    %127 = arith.mulf %126, %125 : vector<4x256xf32>
    %cst_38 = arith.constant 1.000000e+00 : f32
    %128 = vector.broadcast %cst_38 : f32 to vector<1x256xf32>
    %129 = arith.subf %128, %6 : vector<1x256xf32>
    %130 = vector.broadcast %129 : vector<1x256xf32> to vector<4x256xf32>
    %131 = arith.mulf %130, %122 : vector<4x256xf32>
    %132 = arith.addf %127, %131 : vector<4x256xf32>
    %c5 = arith.constant 5 : index
    %c0_39 = arith.constant 0 : index
    %c0_40 = arith.constant 0 : index
    %133 = vector.load %arg4[%c5, %c0_39, %c0_40] : memref<9x4x4xf32, #tpu.memory_space<vmem>>, vector<1x4x4xf32>
    %134 = vector.shape_cast %133 : vector<1x4x4xf32> to vector<4x4xf32>
    %cst_41 = arith.constant dense<0.000000e+00> : vector<4x256xf32>
    %135 = tpu.matmul %134, %132, %cst_41 {dimension_numbers = #tpu.dot_dimension_numbers<[1], [0], [0], [1], [0, 0, 1, 1], [], []>} : vector<4x4xf32>, vector<4x256xf32>, vector<4x256xf32> -> vector<4x256xf32>
    %136 = arith.addf %119, %135 : vector<4x256xf32>
    %137 = vector.extract_strided_slice %48 {offsets = [0, 16], sizes = [4, 240], strides = [1, 1]} : vector<4x256xf32> to vector<4x240xf32>
    %138 = vector.extract_strided_slice %48 {offsets = [0, 0], sizes = [4, 16], strides = [1, 1]} : vector<4x256xf32> to vector<4x16xf32>
    %139 = tpu.concatenate %137, %138 in 1 : vector<4x240xf32>, vector<4x16xf32> -> vector<4x256xf32>
    %140 = vector.extract_strided_slice %48 {offsets = [0, 240], sizes = [4, 16], strides = [1, 1]} : vector<4x256xf32> to vector<4x16xf32>
    %141 = vector.extract_strided_slice %48 {offsets = [0, 0], sizes = [4, 240], strides = [1, 1]} : vector<4x256xf32> to vector<4x240xf32>
    %142 = tpu.concatenate %140, %141 in 1 : vector<4x16xf32>, vector<4x240xf32> -> vector<4x256xf32>
    %143 = vector.broadcast %4 : vector<1x256xf32> to vector<4x256xf32>
    %144 = arith.mulf %143, %142 : vector<4x256xf32>
    %cst_42 = arith.constant 1.000000e+00 : f32
    %145 = vector.broadcast %cst_42 : f32 to vector<1x256xf32>
    %146 = arith.subf %145, %4 : vector<1x256xf32>
    %147 = vector.broadcast %146 : vector<1x256xf32> to vector<4x256xf32>
    %148 = arith.mulf %147, %139 : vector<4x256xf32>
    %149 = arith.addf %144, %148 : vector<4x256xf32>
    %150 = vector.extract_strided_slice %149 {offsets = [0, 255], sizes = [4, 1], strides = [1, 1]} : vector<4x256xf32> to vector<4x1xf32>
    %151 = vector.extract_strided_slice %149 {offsets = [0, 0], sizes = [4, 255], strides = [1, 1]} : vector<4x256xf32> to vector<4x255xf32>
    %152 = tpu.concatenate %150, %151 in 1 : vector<4x1xf32>, vector<4x255xf32> -> vector<4x256xf32>
    %153 = vector.extract_strided_slice %149 {offsets = [0, 1], sizes = [4, 255], strides = [1, 1]} : vector<4x256xf32> to vector<4x255xf32>
    %154 = vector.extract_strided_slice %149 {offsets = [0, 0], sizes = [4, 1], strides = [1, 1]} : vector<4x256xf32> to vector<4x1xf32>
    %155 = tpu.concatenate %153, %154 in 1 : vector<4x255xf32>, vector<4x1xf32> -> vector<4x256xf32>
    %156 = vector.broadcast %5 : vector<1x256xf32> to vector<4x256xf32>
    %157 = arith.mulf %156, %155 : vector<4x256xf32>
    %cst_43 = arith.constant 1.000000e+00 : f32
    %158 = vector.broadcast %cst_43 : f32 to vector<1x256xf32>
    %159 = arith.subf %158, %5 : vector<1x256xf32>
    %160 = vector.broadcast %159 : vector<1x256xf32> to vector<4x256xf32>
    %161 = arith.mulf %160, %152 : vector<4x256xf32>
    %162 = arith.addf %157, %161 : vector<4x256xf32>
    %c6 = arith.constant 6 : index
    %c0_44 = arith.constant 0 : index
    %c0_45 = arith.constant 0 : index
    %163 = vector.load %arg4[%c6, %c0_44, %c0_45] : memref<9x4x4xf32, #tpu.memory_space<vmem>>, vector<1x4x4xf32>
    %164 = vector.shape_cast %163 : vector<1x4x4xf32> to vector<4x4xf32>
    %cst_46 = arith.constant dense<0.000000e+00> : vector<4x256xf32>
    %165 = tpu.matmul %164, %162, %cst_46 {dimension_numbers = #tpu.dot_dimension_numbers<[1], [0], [0], [1], [0, 0, 1, 1], [], []>} : vector<4x4xf32>, vector<4x256xf32>, vector<4x256xf32> -> vector<4x256xf32>
    %166 = arith.addf %136, %165 : vector<4x256xf32>
    %c7 = arith.constant 7 : index
    %c0_47 = arith.constant 0 : index
    %c0_48 = arith.constant 0 : index
    %167 = vector.load %arg4[%c7, %c0_47, %c0_48] : memref<9x4x4xf32, #tpu.memory_space<vmem>>, vector<1x4x4xf32>
    %168 = vector.shape_cast %167 : vector<1x4x4xf32> to vector<4x4xf32>
    %cst_49 = arith.constant dense<0.000000e+00> : vector<4x256xf32>
    %169 = tpu.matmul %168, %149, %cst_49 {dimension_numbers = #tpu.dot_dimension_numbers<[1], [0], [0], [1], [0, 0, 1, 1], [], []>} : vector<4x4xf32>, vector<4x256xf32>, vector<4x256xf32> -> vector<4x256xf32>
    %170 = arith.addf %166, %169 : vector<4x256xf32>
    %171 = vector.extract_strided_slice %149 {offsets = [0, 1], sizes = [4, 255], strides = [1, 1]} : vector<4x256xf32> to vector<4x255xf32>
    %172 = vector.extract_strided_slice %149 {offsets = [0, 0], sizes = [4, 1], strides = [1, 1]} : vector<4x256xf32> to vector<4x1xf32>
    %173 = tpu.concatenate %171, %172 in 1 : vector<4x255xf32>, vector<4x1xf32> -> vector<4x256xf32>
    %174 = vector.extract_strided_slice %149 {offsets = [0, 255], sizes = [4, 1], strides = [1, 1]} : vector<4x256xf32> to vector<4x1xf32>
    %175 = vector.extract_strided_slice %149 {offsets = [0, 0], sizes = [4, 255], strides = [1, 1]} : vector<4x256xf32> to vector<4x255xf32>
    %176 = tpu.concatenate %174, %175 in 1 : vector<4x1xf32>, vector<4x255xf32> -> vector<4x256xf32>
    %177 = vector.broadcast %6 : vector<1x256xf32> to vector<4x256xf32>
    %178 = arith.mulf %177, %176 : vector<4x256xf32>
    %cst_50 = arith.constant 1.000000e+00 : f32
    %179 = vector.broadcast %cst_50 : f32 to vector<1x256xf32>
    %180 = arith.subf %179, %6 : vector<1x256xf32>
    %181 = vector.broadcast %180 : vector<1x256xf32> to vector<4x256xf32>
    %182 = arith.mulf %181, %173 : vector<4x256xf32>
    %183 = arith.addf %178, %182 : vector<4x256xf32>
    %c8 = arith.constant 8 : index
    %c0_51 = arith.constant 0 : index
    %c0_52 = arith.constant 0 : index
    %184 = vector.load %arg4[%c8, %c0_51, %c0_52] : memref<9x4x4xf32, #tpu.memory_space<vmem>>, vector<1x4x4xf32>
    %185 = vector.shape_cast %184 : vector<1x4x4xf32> to vector<4x4xf32>
    %cst_53 = arith.constant dense<0.000000e+00> : vector<4x256xf32>
    %186 = tpu.matmul %185, %183, %cst_53 {dimension_numbers = #tpu.dot_dimension_numbers<[1], [0], [0], [1], [0, 0, 1, 1], [], []>} : vector<4x4xf32>, vector<4x256xf32>, vector<4x256xf32> -> vector<4x256xf32>
    %187 = arith.addf %170, %186 : vector<4x256xf32>
    %cst_54 = arith.constant dense<0.000000e+00> : vector<4xf32>
    %188 = vector.multi_reduction <add>, %187, %cst_54 [1] : vector<4x256xf32> to vector<4xf32>
    %189 = vector.shape_cast %188 : vector<4xf32> to vector<4x1xf32>
    %190 = arith.mulf %187, %187 : vector<4x256xf32>
    %cst_55 = arith.constant dense<0.000000e+00> : vector<4xf32>
    %191 = vector.multi_reduction <add>, %190, %cst_55 [1] : vector<4x256xf32> to vector<4xf32>
    %192 = vector.shape_cast %191 : vector<4xf32> to vector<4x1xf32>
    %cst_56 = arith.constant 3.906250e-03 : f32
    %193 = vector.broadcast %cst_56 : f32 to vector<4x1xf32>
    %194 = arith.mulf %189, %193 : vector<4x1xf32>
    %cst_57 = arith.constant 3.906250e-03 : f32
    %195 = vector.broadcast %cst_57 : f32 to vector<4x1xf32>
    %196 = arith.mulf %192, %195 : vector<4x1xf32>
    %197 = arith.mulf %194, %194 : vector<4x1xf32>
    %198 = arith.subf %196, %197 : vector<4x1xf32>
    %199 = vector.broadcast %194 : vector<4x1xf32> to vector<4x256xf32>
    %200 = arith.subf %187, %199 : vector<4x256xf32>
    %cst_58 = arith.constant 9.99999974E-6 : f32
    %201 = vector.broadcast %cst_58 : f32 to vector<4x1xf32>
    %202 = arith.addf %198, %201 : vector<4x1xf32>
    %203 = math.rsqrt %202 : vector<4x1xf32>
    %204 = vector.broadcast %203 : vector<4x1xf32> to vector<4x256xf32>
    %205 = arith.mulf %200, %204 : vector<4x256xf32>
    %cst_59 = arith.constant 0.000000e+00 : f32
    %206 = vector.broadcast %cst_59 : f32 to vector<4x256xf32>
    %207 = arith.maximumf %205, %206 : vector<4x256xf32>
    %c0_60 = arith.constant 0 : index
    %c0_61 = arith.constant 0 : index
    %208 = vector.load %arg5[%c0_60, %c0_61] : memref<16x4xf32, #tpu.memory_space<vmem>>, vector<16x4xf32>
    %cst_62 = arith.constant dense<0.000000e+00> : vector<16x256xf32>
    %209 = tpu.matmul %208, %207, %cst_62 {dimension_numbers = #tpu.dot_dimension_numbers<[1], [0], [0], [1], [0, 0, 1, 1], [], []>} : vector<16x4xf32>, vector<4x256xf32>, vector<16x256xf32> -> vector<16x256xf32>
    %c0_63 = arith.constant 0 : index
    %c0_64 = arith.constant 0 : index
    %210 = vector.load %arg6[%c0_63, %c0_64] : memref<16x1xf32, #tpu.memory_space<vmem>>, vector<16x1xf32>
    %211 = vector.broadcast %210 : vector<16x1xf32> to vector<16x256xf32>
    %212 = arith.addf %209, %211 : vector<16x256xf32>
    %213 = arith.addf %212, %1 : vector<16x256xf32>
    %c0_65 = arith.constant 0 : index
    %c0_66 = arith.constant 0 : index
    %c0_67 = arith.constant 0 : index
    %214 = vector.load %arg7[%c0_65, %c0_66, %c0_67] : memref<1x16x256xf32, #tpu.memory_space<vmem>>, vector<1x16x256xf32>
    %215 = vector.shape_cast %214 : vector<1x16x256xf32> to vector<16x256xf32>
    %216 = vector.shape_cast %213 : vector<16x256xf32> to vector<1x16x256xf32>
    tpu.vector_store %arg7[%c0_65, %c0_66, %c0_67], %216 {strides = array<i32>} : memref<1x16x256xf32, #tpu.memory_space<vmem>>, vector<1x16x256xf32>,
    return
  }
  func.func @transform_0(%arg0: i32) -> (i32, i32, i32) {
    %c0_i32 = arith.constant 0 : i32
    %c0_i32_0 = arith.constant 0 : i32
    %c0_i32_1 = arith.constant 0 : i32
    return %arg0, %c0_i32, %c0_i32_0 : i32, i32, i32
  }
  func.func @transform_1(%arg0: i32) -> (i32, i32) {
    %c0_i32 = arith.constant 0 : i32
    %c0_i32_0 = arith.constant 0 : i32
    %c0_i32_1 = arith.constant 0 : i32
    return %c0_i32, %c0_i32_0 : i32, i32
  }
  func.func @transform_2(%arg0: i32) -> (i32, i32) {
    %c0_i32 = arith.constant 0 : i32
    %c0_i32_0 = arith.constant 0 : i32
    %c0_i32_1 = arith.constant 0 : i32
    return %c0_i32, %c0_i32_0 : i32, i32
  }
  func.func @transform_3(%arg0: i32) -> (i32, i32, i32) {
    %c0_i32 = arith.constant 0 : i32
    %c0_i32_0 = arith.constant 0 : i32
    %c0_i32_1 = arith.constant 0 : i32
    %c0_i32_2 = arith.constant 0 : i32
    return %c0_i32, %c0_i32_0, %c0_i32_1 : i32, i32, i32
  }
  func.func @transform_4(%arg0: i32) -> (i32, i32) {
    %c0_i32 = arith.constant 0 : i32
    %c0_i32_0 = arith.constant 0 : i32
    %c0_i32_1 = arith.constant 0 : i32
    return %c0_i32, %c0_i32_0 : i32, i32
  }
  func.func @transform_5(%arg0: i32) -> (i32, i32) {
    %c0_i32 = arith.constant 0 : i32
    %c0_i32_0 = arith.constant 0 : i32
    %c0_i32_1 = arith.constant 0 : i32
    return %c0_i32, %c0_i32_0 : i32, i32
  }
  func.func @transform_6(%arg0: i32) -> (i32, i32, i32) {
    %c0_i32 = arith.constant 0 : i32
    %c0_i32_0 = arith.constant 0 : i32
    %c0_i32_1 = arith.constant 0 : i32
    return %arg0, %c0_i32, %c0_i32_0 : i32, i32, i32
  }
}

</mosaic_0001>

<llo_original>
// kernel: tpu_custom_call.1
$region0: #{tpu_custom_call.1}
  #allocation0 [shape = 'u32[]', space=smem, size = 0x4, offset = 0x4, fixed_abs, tag = 'smem constant byte address 0x4 - core index']
  #allocation1 [shape = 'u32[72,128]{1,0:T(1,128)}', space=vmem, size = 0x9000, scoped, tag = 'internal scratch']
  %s0 = inlined_call_operand.vmem [shape: f32[2,16,256], index: 0, kind: input, shape index: {}]
  %s1 = inlined_call_operand.vmem [shape: f32[4,256], index: 1, kind: input, shape index: {}]
  %s2 = inlined_call_operand.hbm [shape: f32[4,16], index: 2, kind: input, shape index: {}]
  %s3 = inlined_call_operand.vmem [shape: f32[9,4,4], index: 3, kind: input, shape index: {}]
  %s4 = inlined_call_operand.vmem [shape: f32[16,4], index: 4, kind: input, shape index: {}]
  %s5 = inlined_call_operand.vmem [shape: f32[16,1], index: 5, kind: input, shape index: {}]
  %s6 = inlined_call_operand.hbm [shape: f32[2,16,256], index: 6, kind: output, shape index: {}]
  %s7 = sld [smem:[#allocation0]]
  $region61: #{tpu_custom_call.1} parent=0
    _
  %s9 = ssub.s32 1, %s7
  %s10 = scalar_select 0, %s9, %s7
  $region1: #{tpu_custom_call.1} parent=0
    #allocation2 [shape = 'u8[2048]{0}', space=vmem, size = 0x800, scoped, tag = 'input window, operand 2, single buffered']
    #allocation3 [shape = 's32[2]{0}', space=sflag, size = 0x8, scoped, tag = 'scoped memory for tpu_custom_call.1']
    #allocation4 [shape = 's32[2]{0}', space=sflag, size = 0x8, scoped, tag = 'scoped memory for tpu_custom_call.1']
    #allocation5 [shape = 'u8[32768]{0}', space=vmem, size = 0x8000, scoped, tag = 'output window, operand 0']
    %11 = vsyncpa [#allocation3], 0
    %12 = vsyncpa [#allocation4], 0
    %s13 = scalar_lea.sflag [#allocation4], 1
    %14 = vsyncpa %s13, 0
    loop: start=0, step=1, limit=4
    $region2: #{tpu_custom_call.1} parent=1 // loop_pre_header
      _
    $region3: #{tpu_custom_call.1} parent=1 // loop_header
      %s16 = sphi 0, %s20
      %p17 = scmp.ge.s32.totalorder %s16, 4
      %s26 = sphi 0, %s28
      %s29 = sphi 0, %s26
      %s30 = sphi 0, %s29
      %s46 = sphi 0, %s30
      %s50 = sphi 0, %s50
      %s52 = sphi 0, %s50
      %s53 = sphi 0, %s52
      %s67 = sphi 0, %s53
      %s71 = sphi 0, %s71
      %s73 = sphi 0, %s71
      %s74 = sphi 0, %s73
      %s88 = sphi 0, %s74
      %s92 = sphi 0, %s92
      %s94 = sphi 0, %s92
      %s95 = sphi 0, %s94
      %s109 = sphi 0, %s95
      %s113 = sphi 0, %s113
      %s115 = sphi 0, %s113
      %s116 = sphi 0, %s115
      %s130 = sphi 0, %s116
      %s134 = sphi 0, %s134
      %s136 = sphi 0, %s134
      %s137 = sphi 0, %s136
      %s151 = sphi 0, %s137
      %s157 = sphi 0, %s159
      %s160 = sphi 0, %s157
      %s161 = sphi 0, %s160
      %s177 = sphi 0, %s161
    $region4: #{tpu_custom_call.1} parent=1 // loop_header_branch
      %19 = sbr.rel (%p17) target = $region8
    $region5: #{tpu_custom_call.1} parent=1 // loop_body
      %s21 = ssub.s32 %s16, 1
      %s22 = ssub.s32 %s16, 2
      %s23 = sadd.s32 %s16, 1
      %s24 = ssub.s32 %s16, %s23
      %p25 = scmp.eq.s32.totalorder %s24, 0
      %s27 = sadd.s32 %s26, 1
      %s28 = scalar_select %p25, %s26, %s27
      %p31 = pneg %p25
      %p32 = scmp.eq.s32.totalorder %s16, 1
      %p33 = por %p31, %p32
      %p34 = scmp.ne.s32.totalorder %s26, %s29
      %p35 = scmp.eq.s32.totalorder %s16, 0
      %p36 = por %p34, %p35
      %p37 = scmp.ne.s32.totalorder %s26, %s29
      %p38 = scmp.eq.s32.totalorder %s21, 1
      %p39 = por %p37, %p38
      %p40 = scmp.ne.s32.totalorder %s29, %s30
      %p41 = scmp.eq.s32.totalorder %s21, 0
      %p42 = por %p40, %p41
      %p43 = scmp.ne.s32.totalorder %s29, %s30
      %p44 = scmp.eq.s32.totalorder %s22, 1
      %p45 = por %p43, %p44
      %p47 = scmp.ne.s32.totalorder %s30, %s46
      %p48 = scmp.eq.s32.totalorder %s22, 0
      %p49 = por %p47, %p48
      %s51 = sadd.s32 %s50, 1
      %p54 = scmp.eq.s32.totalorder %s16, 1
      %p55 = scmp.ne.s32.totalorder %s50, %s52
      %p56 = scmp.eq.s32.totalorder %s16, 0
      %p57 = por %p55, %p56
      %p58 = scmp.ne.s32.totalorder %s50, %s52
      %p59 = scmp.eq.s32.totalorder %s21, 1
      %p60 = por %p58, %p59
      %p61 = scmp.ne.s32.totalorder %s52, %s53
      %p62 = scmp.eq.s32.totalorder %s21, 0
      %p63 = por %p61, %p62
      %p64 = scmp.ne.s32.totalorder %s52, %s53
      %p65 = scmp.eq.s32.totalorder %s22, 1
      %p66 = por %p64, %p65
      %p68 = scmp.ne.s32.totalorder %s53, %s67
      %p69 = scmp.eq.s32.totalorder %s22, 0
      %p70 = por %p68, %p69
      %s72 = sadd.s32 %s71, 1
      %p75 = scmp.eq.s32.totalorder %s16, 1
      %p76 = scmp.ne.s32.totalorder %s71, %s73
      %p77 = scmp.eq.s32.totalorder %s16, 0
      %p78 = por %p76, %p77
      %p79 = scmp.ne.s32.totalorder %s71, %s73
      %p80 = scmp.eq.s32.totalorder %s21, 1
      %p81 = por %p79, %p80
      %p82 = scmp.ne.s32.totalorder %s73, %s74
      %p83 = scmp.eq.s32.totalorder %s21, 0
      %p84 = por %p82, %p83
      %p85 = scmp.ne.s32.totalorder %s73, %s74
      %p86 = scmp.eq.s32.totalorder %s22, 1
      %p87 = por %p85, %p86
      %p89 = scmp.ne.s32.totalorder %s74, %s88
      %p90 = scmp.eq.s32.totalorder %s22, 0
      %p91 = por %p89, %p90
      %s93 = sadd.s32 %s92, 1
      %p96 = scmp.eq.s32.totalorder %s16, 1
      %p97 = scmp.ne.s32.totalorder %s92, %s94
      %p98 = scmp.eq.s32.totalorder %s16, 0
      %p99 = por %p97, %p98
      %p100 = scmp.ne.s32.totalorder %s92, %s94
      %p101 = scmp.eq.s32.totalorder %s21, 1
      %p102 = por %p100, %p101
      %p103 = scmp.ne.s32.totalorder %s94, %s95
      %p104 = scmp.eq.s32.totalorder %s21, 0
      %p105 = por %p103, %p104
      %p106 = scmp.ne.s32.totalorder %s94, %s95
      %p107 = scmp.eq.s32.totalorder %s22, 1
      %p108 = por %p106, %p107
      %p110 = scmp.ne.s32.totalorder %s95, %s109
      %p111 = scmp.eq.s32.totalorder %s22, 0
      %p112 = por %p110, %p111
      %s114 = sadd.s32 %s113, 1
      %p117 = scmp.eq.s32.totalorder %s16, 1
      %p118 = scmp.ne.s32.totalorder %s113, %s115
      %p119 = scmp.eq.s32.totalorder %s16, 0
      %p120 = por %p118, %p119
      %p121 = scmp.ne.s32.totalorder %s113, %s115
      %p122 = scmp.eq.s32.totalorder %s21, 1
      %p123 = por %p121, %p122
      %p124 = scmp.ne.s32.totalorder %s115, %s116
      %p125 = scmp.eq.s32.totalorder %s21, 0
      %p126 = por %p124, %p125
      %p127 = scmp.ne.s32.totalorder %s115, %s116
      %p128 = scmp.eq.s32.totalorder %s22, 1
      %p129 = por %p127, %p128
      %p131 = scmp.ne.s32.totalorder %s116, %s130
      %p132 = scmp.eq.s32.totalorder %s22, 0
      %p133 = por %p131, %p132
      %s135 = sadd.s32 %s134, 1
      %p138 = scmp.eq.s32.totalorder %s16, 1
      %p139 = scmp.ne.s32.totalorder %s134, %s136
      %p140 = scmp.eq.s32.totalorder %s16, 0
      %p141 = por %p139, %p140
      %p142 = scmp.ne.s32.totalorder %s134, %s136
      %p143 = scmp.eq.s32.totalorder %s21, 1
      %p144 = por %p142, %p143
      %p145 = scmp.ne.s32.totalorder %s136, %s137
      %p146 = scmp.eq.s32.totalorder %s21, 0
      %p147 = por %p145, %p146
      %p148 = scmp.ne.s32.totalorder %s136, %s137
      %p149 = scmp.eq.s32.totalorder %s22, 1
      %p150 = por %p148, %p149
      %p152 = scmp.ne.s32.totalorder %s137, %s151
      %p153 = scmp.eq.s32.totalorder %s22, 0
      %p154 = por %p152, %p153
      %s155 = ssub.s32 %s16, %s23
      %p156 = scmp.eq.s32.totalorder %s155, 0
      %s158 = sadd.s32 %s157, 1
      %s159 = scalar_select %p156, %s157, %s158
      %p162 = pneg %p156
      %p163 = scmp.eq.s32.totalorder %s16, 1
      %p164 = por %p162, %p163
      %p165 = scmp.ne.s32.totalorder %s157, %s160
      %p166 = scmp.eq.s32.totalorder %s16, 0
      %p167 = por %p165, %p166
      %p168 = scmp.ne.s32.totalorder %s157, %s160
      %p169 = scmp.eq.s32.totalorder %s21, 1
      %p170 = por %p168, %p169
      %p171 = scmp.ne.s32.totalorder %s160, %s161
      %p172 = scmp.eq.s32.totalorder %s21, 0
      %p173 = por %p171, %p172
      %p174 = scmp.ne.s32.totalorder %s160, %s161
      %p175 = scmp.eq.s32.totalorder %s22, 1
      %p176 = por %p174, %p175
      %p178 = scmp.ne.s32.totalorder %s161, %s177
      %p179 = scmp.eq.s32.totalorder %s22, 0
      %p180 = por %p178, %p179
      %p181 = scmp.le.s32.totalorder 1, %s16
      %p182 = scmp.lt.s32.totalorder %s16, 3
      %p183 = pnand %p181, %p182
      %p184 = pneg %p183
      // Predicated region
      $region9: #{tpu_custom_call.1} parent=5 // pred_check
        _
      $region10: #{tpu_custom_call.1} parent=5 // pred_check_branch
        %186 = sbr.rel (%p183) target = $region12
      $region11: #{tpu_custom_call.1} parent=5 // pred_region
        %s187 = ssub.s32 %s16, 1
        // Predicated region
        $region13: #{tpu_custom_call.1} parent=11 // pred_check
          %p188 = pneg %p63
        $region14: #{tpu_custom_call.1} parent=11 // pred_check_branch
          %190 = sbr.rel (%p188) target = $region16
        $region15: #{tpu_custom_call.1} parent=11 // pred_region
          _
        $region16: #{tpu_custom_call.1} parent=11 // pred_fallthru
          _
        // Predicated region
        $region17: #{tpu_custom_call.1} parent=11 // pred_check
          %p191 = pneg %p84
        $region18: #{tpu_custom_call.1} parent=11 // pred_check_branch
          %193 = sbr.rel (%p191) target = $region20
        $region19: #{tpu_custom_call.1} parent=11 // pred_region
          %195 = vsyncadd [#allocation3], 0
          %s197 = sshll.u32 %s2, 4
          %s198 = int_to_ptr.hbm [resolvable:$true] %s197
          %s199 = sshll.u32 [#allocation2], 4
          %s200 = int_to_ptr.vmem [resolvable:$true] %s199
          %202 = dma.hbm_to_vmem [thread:$0]  %s198, 64, %s200, [#allocation3]
        $region20: #{tpu_custom_call.1} parent=11 // pred_fallthru
          _
        // Predicated region
        $region21: #{tpu_custom_call.1} parent=11 // pred_check
          %p203 = pneg %p105
        $region22: #{tpu_custom_call.1} parent=11 // pred_check_branch
          %205 = sbr.rel (%p203) target = $region24
        $region23: #{tpu_custom_call.1} parent=11 // pred_region
          _
        $region24: #{tpu_custom_call.1} parent=11 // pred_fallthru
          _
        // Predicated region
        $region25: #{tpu_custom_call.1} parent=11 // pred_check
          %p206 = pneg %p126
        $region26: #{tpu_custom_call.1} parent=11 // pred_check_branch
          %208 = sbr.rel (%p206) target = $region28
        $region27: #{tpu_custom_call.1} parent=11 // pred_region
          _
        $region28: #{tpu_custom_call.1} parent=11 // pred_fallthru
          _
        // Predicated region
        $region29: #{tpu_custom_call.1} parent=11 // pred_check
          %p209 = pneg %p147
        $region30: #{tpu_custom_call.1} parent=11 // pred_check_branch
          %211 = sbr.rel (%p209) target = $region32
        $region31: #{tpu_custom_call.1} parent=11 // pred_region
          _
        $region32: #{tpu_custom_call.1} parent=11 // pred_fallthru
          _
      $region12: #{tpu_custom_call.1} parent=5 // pred_fallthru
        _
      %p212 = scmp.lt.s32.totalorder %s16, 2
      // Predicated region
      $region33: #{tpu_custom_call.1} parent=5 // pred_check
        %p213 = pneg %p212
      $region34: #{tpu_custom_call.1} parent=5 // pred_check_branch
        %215 = sbr.rel (%p213) target = $region36
      $region35: #{tpu_custom_call.1} parent=5 // pred_region
        // Predicated region
        $region37: #{tpu_custom_call.1} parent=35 // pred_check
          %p216 = pneg %p36
        $region38: #{tpu_custom_call.1} parent=35 // pred_check_branch
          %218 = sbr.rel (%p216) target = $region40
        $region39: #{tpu_custom_call.1} parent=35 // pred_region
          %p219 = scmp.lt.s32.totalorder %s16, 1
          %s220 = scalar_select %p219, %s16, 1
          %s221 = smul.addr %s220, 4
          %s222 = smul.addr %s221, 8
          %s223 = scalar_lea.vmem %s0, %s222
        $region40: #{tpu_custom_call.1} parent=35 // pred_fallthru
          _
      $region36: #{tpu_custom_call.1} parent=5 // pred_fallthru
        _
      %p224 = scmp.le.s32.totalorder 1, %s16
      %p225 = scmp.lt.s32.totalorder %s16, 3
      %p226 = pnand %p224, %p225
      %p227 = pneg %p226
      // Predicated region
      $region41: #{tpu_custom_call.1} parent=5 // pred_check
        _
      $region42: #{tpu_custom_call.1} parent=5 // pred_check_branch
        %229 = sbr.rel (%p226) target = $region44
      $region43: #{tpu_custom_call.1} parent=5 // pred_region
        %s230 = ssub.s32 %s16, 1
        // Predicated region
        $region45: #{tpu_custom_call.1} parent=43 // pred_check
          %p231 = pneg %p84
        $region46: #{tpu_custom_call.1} parent=43 // pred_check_branch
          %233 = sbr.rel (%p231) target = $region48
        $region47: #{tpu_custom_call.1} parent=43 // pred_region
          %235 = dma.done [#allocation3], 64
        $region48: #{tpu_custom_call.1} parent=43 // pred_fallthru
          _
        %p236 = scmp.lt.s32.totalorder %s21, 1
        %s237 = scalar_select %p236, %s21, 1
        %s238 = smul.addr %s237, 4
        %s239 = smul.addr %s238, 8
        %s240 = scalar_lea.vmem %s0, %s239
        %p241 = pneg %p42
        %p242 = pneg %p39
        %p243 = pneg %p63
        %p244 = pneg %p60
        %p245 = pneg %p84
        %p246 = pneg %p81
        %p247 = pneg %p105
        %p248 = pneg %p102
        %p249 = pneg %p126
        %p250 = pneg %p123
        %p251 = pneg %p147
        %p252 = pneg %p144
        %p253 = pneg %p173
        %p254 = pneg %p170
        %s255 = sand.u32 %s160, 1
        %s256 = scalar_lea.sflag [#allocation4], %s255
        %s257 = sand.u32 %s160, 1
        %s258 = smul.addr %s257, 32
        %s259 = scalar_lea.vmem [#allocation5], %s258
        %p260 = scmp.lt.s32.totalorder %s21, 1
        %s261 = scalar_select %p260, %s21, 1
        %s262 = smul.addr %s261, 4
        %s263 = smul.addr %s262, 8
        %s264 = scalar_lea.vmem %s0, %s263
        %v265 = vld [vmem:[%s264] sm:$0xff]
        %v266 = vld [vmem:[%s264 + $0x8] sm:$0xff]
        %v267 = vld [vmem:[%s264 + $0x10] sm:$0xff]
        %v268 = vld [vmem:[%s264 + $0x18] sm:$0xff]
        %v269 = vld [vmem:[%s1] sm:$0xff]
        %v270 = vadd.f32 %v265, %v266
        %271 = vadd.xlane.f32.xlu0 %v270
        %v272 = vpop.xlane.xlu0 %271
        %v273 = vadd.f32 %v267, %v268
        %274 = vadd.xlane.f32.xlu0 %v273
        %v275 = vpop.xlane.xlu0 %274
        %v276 = vmul.f32 %v265, %v265
        %v277 = vmul.f32 %v266, %v266
        %v278 = vmul.f32 %v267, %v267
        %v279 = vmul.f32 %v268, %v268
        %v280 = vadd.f32 %v276, %v277
        %281 = vadd.xlane.f32.xlu0 %v280
        %v282 = vpop.xlane.xlu0 %281
        %v283 = vadd.f32 %v278, %v279
        %284 = vadd.xlane.f32.xlu0 %v283
        %v285 = vpop.xlane.xlu0 %284
        %v286 = vmul.f32 %v272, 0.00390625
        %v287 = vmul.f32 %v275, 0.00390625
        %v288 = vmul.f32 %v282, 0.00390625
        %v289 = vmul.f32 %v285, 0.00390625
        %v290 = vmul.f32 %v286, %v286
        %v291 = vmul.f32 %v287, %v287
        %v292 = vsub.f32 %v288, %v290
        %v293 = vsub.f32 %v289, %v291
        %v294 = vsub.f32 %v265, %v286
        %v295 = vsub.f32 %v266, %v286
        %v296 = vsub.f32 %v267, %v287
        %v297 = vsub.f32 %v268, %v287
        %v298 = vadd.f32 %v292, 1e-05
        %v299 = vadd.f32 %v293, 1e-05
        %v300 = vrsqrt.pop %v298
        %v301 = vmul.f32 %v300, %v298
        %v302 = vmul.f32 %v301, %v300
        %v303 = vmul.f32 0.5, %v302
        %v304 = vsub.f32 1.5, %v303
        %v305 = vmul.f32 %v300, %v304
        %vm306 = vweird.f32 %v298
        %vm307 = vweird.f32 %v300
        %vm308 = vmor %vm306, %vm307
        %v309 = vsel %vm308, %v300, %v305
        %v310 = vrsqrt.pop %v299
        %v311 = vmul.f32 %v310, %v299
        %v312 = vmul.f32 %v311, %v310
        %v313 = vmul.f32 0.5, %v312
        %v314 = vsub.f32 1.5, %v313
        %v315 = vmul.f32 %v310, %v314
        %vm316 = vweird.f32 %v299
        %vm317 = vweird.f32 %v310
        %vm318 = vmor %vm316, %vm317
        %v319 = vsel %vm318, %v310, %v315
        %v320 = vmul.f32 %v294, %v309
        %v321 = vmul.f32 %v295, %v309
        %v322 = vmul.f32 %v296, %v319
        %v323 = vmul.f32 %v297, %v319
        %v324 = vmax.f32 %v320, 0.0
        %v325 = vmax.f32 %v321, 0.0
        %v326 = vmax.f32 %v322, 0.0
        %v327 = vmax.f32 %v323, 0.0
        %v328 = vld [vmem:[#allocation2] sm:$0xf]
        %vm329 = vcmask 130048
        %v331 = vsel %vm329, %v328, 0
        %333 = vmatpush.msra.mxu0 0.0
        %334 = vmatpush.msra.mxu0 0.0
        %335 = vmatpush.msra.mxu0 0.0
        %336 = vmatpush.msra.mxu0 0.0
        %337 = vmatpush.msra.mxu0 0.0
        %338 = vmatpush.msra.mxu0 0.0
        %339 = vmatpush.msra.mxu0 0.0
        %340 = vmatpush.msra.mxu0 0.0
        %341 = vmatpush.msra.mxu0 0.0
        %342 = vmatpush.msra.mxu0 0.0
        %343 = vmatpush.msra.mxu0 0.0
        %344 = vmatpush.msra.mxu0 0.0
        %345 = vmatpush.msra.mxu0 0.0
        %346 = vmatpush.msra.mxu0 0.0
        %347 = vmatpush.msra.mxu0 %v326
        %348 = vmatpush.msra.mxu0 %v324
        %349 = vmatmul.f32.gmra.mxu0 %v331
        %v350 = vpop.f32.mrf.mxu0
        %v351 = vadd.f32 0.0, %v350
        %352 = vdwg.mxu0
        %353 = vmatpush.msra.mxu0 0.0
        %354 = vmatpush.msra.mxu0 0.0
        %355 = vmatpush.msra.mxu0 0.0
        %356 = vmatpush.msra.mxu0 0.0
        %357 = vmatpush.msra.mxu0 0.0
        %358 = vmatpush.msra.mxu0 0.0
        %359 = vmatpush.msra.mxu0 0.0
        %360 = vmatpush.msra.mxu0 0.0
        %361 = vmatpush.msra.mxu0 0.0
        %362 = vmatpush.msra.mxu0 0.0
        %363 = vmatpush.msra.mxu0 0.0
        %364 = vmatpush.msra.mxu0 0.0
        %365 = vmatpush.msra.mxu0 0.0
        %366 = vmatpush.msra.mxu0 0.0
        %367 = vmatpush.msra.mxu0 %v327
        %368 = vmatpush.msra.mxu0 %v325
        %369 = vmatmul.f32.gmra.mxu0 %v331
        %v370 = vpop.f32.mrf.mxu0
        %v371 = vadd.f32 0.0, %v370
        %372 = vdwg.mxu0
        %vm373 = vcmask 1043456
        %v374 = vsel %vm373, %v351, 0.0
        %v375 = vsel %vm373, %v371, 0.0
        %v376 = vadd.f32 %v374, %v375
        %377 = vadd.xlane.f32.xlu0 %v376
        %v378 = vpop.xlane.xlu0 %377
        %v379 = vmul.f32 %v351, %v351
        %v380 = vmul.f32 %v371, %v371
        %v381 = vsel %vm373, %v379, 0.0
        %v382 = vsel %vm373, %v380, 0.0
        %v383 = vadd.f32 %v381, %v382
        %384 = vadd.xlane.f32.xlu0 %v383
        %v385 = vpop.xlane.xlu0 %384
        %v386 = vmul.f32 %v378, 0.00390625
        %v387 = vmul.f32 %v385, 0.00390625
        %v388 = vmul.f32 %v386, %v386
        %v389 = vsub.f32 %v387, %v388
        %v390 = vsub.f32 %v351, %v386
        %v391 = vsub.f32 %v371, %v386
        %v392 = vadd.f32 %v389, 1e-05
        %v393 = vrsqrt.pop %v392
        %v394 = vmul.f32 %v393, %v392
        %v395 = vmul.f32 %v394, %v393
        %v396 = vmul.f32 0.5, %v395
        %v397 = vsub.f32 1.5, %v396
        %v398 = vmul.f32 %v393, %v397
        %vm399 = vweird.f32 %v392
        %vm400 = vweird.f32 %v393
        %vm401 = vmor %vm399, %vm400
        %v402 = vsel %vm401, %v393, %v398
        %v403 = vmul.f32 %v390, %v402
        %v404 = vmul.f32 %v391, %v402
        %v405 = vmax.f32 %v403, 0.0
        %v406 = vmax.f32 %v404, 0.0
        %408 = vrot.lane.b32.xlu0 %v406, 16
        %v409 = vpop.permute.xlu0 %408
        %412 = vrot.lane.b32.xlu0 %v405, 16
        %v413 = vpop.permute.xlu0 %412
        %v414 = vsel %vm329, %v413, %v409
        %v417 = vsel %vm329, %v409, %v413
        %418 = vrot.lane.b32.xlu0 %v405, 112
        %v419 = vpop.permute.xlu0 %418
        %420 = vrot.lane.b32.xlu0 %v406, 112
        %v421 = vpop.permute.xlu0 %420
        %vm422 = vcmask 916480
        %v423 = vsel %vm422, %v419, %v421
        %v427 = vsel %vm422, %v421, %v419
        %v429 = vperm.slane %v269, 0
        %v430 = vperm.slane %v269, 4
        %v433 = vperm.slane %v429, 0
        %v434 = vperm.slane %v430, 0
        %v435 = vmul.f32 %v433, %v423
        %v436 = vmul.f32 %v434, %v427
        %v437 = vsub.f32 1.0, %v269
        %v439 = vperm.slane %v437, 0
        %v440 = vperm.slane %v437, 4
        %v443 = vperm.slane %v439, 0
        %v444 = vperm.slane %v440, 0
        %v445 = vmul.f32 %v443, %v417
        %v446 = vmul.f32 %v444, %v414
        %v447 = vadd.f32 %v435, %v445
        %v448 = vadd.f32 %v436, %v446
        %450 = vrot.lane.b32.xlu0 %v448, 1
        %v451 = vpop.permute.xlu0 %450
        %454 = vrot.lane.b32.xlu0 %v447, 1
        %v455 = vpop.permute.xlu0 %454
        %vm456 = vcmask 7168
        %v457 = vsel %vm456, %v455, %v451
        %v460 = vsel %vm456, %v451, %v455
        %461 = vrot.lane.b32.xlu0 %v447, 127
        %v462 = vpop.permute.xlu0 %461
        %463 = vrot.lane.b32.xlu0 %v448, 127
        %v464 = vpop.permute.xlu0 %463
        %vm465 = vcmask 1039360
        %v466 = vsel %vm465, %v462, %v464
        %v470 = vsel %vm465, %v464, %v462
        %v471 = vperm.slane %v269, 2
        %v472 = vperm.slane %v269, 6
        %v475 = vperm.slane %v471, 2
        %v476 = vperm.slane %v472, 2
        %v477 = vmul.f32 %v475, %v466
        %v478 = vmul.f32 %v476, %v470
        %v479 = vperm.slane %v437, 2
        %v480 = vperm.slane %v437, 6
        %v483 = vperm.slane %v479, 2
        %v484 = vperm.slane %v480, 2
        %v485 = vmul.f32 %v483, %v460
        %v486 = vmul.f32 %v484, %v457
        %v487 = vadd.f32 %v477, %v485
        %v488 = vadd.f32 %v478, %v486
        %v489 = vld [vmem:[%s3] sm:$0xf]
        %s490 = scalar_lea.vmem %s3, 4
        %v491 = vld [vmem:[%s490] sm:$0xf]
        %vm492 = vcmask 31744
        %v494 = vsel %vm492, %v491, 0
        %v496 = vsel %vm373, %v447, 0
        %v498 = vsel %vm373, %v448, 0
        %500 = vmatpush.msra.mxu0 0.0
        %501 = vmatpush.msra.mxu0 0.0
        %502 = vmatpush.msra.mxu0 0.0
        %503 = vmatpush.msra.mxu0 0.0
        %504 = vmatpush.msra.mxu0 0.0
        %505 = vmatpush.msra.mxu0 0.0
        %506 = vmatpush.msra.mxu0 0.0
        %507 = vmatpush.msra.mxu0 0.0
        %508 = vmatpush.msra.mxu0 0.0
        %509 = vmatpush.msra.mxu0 0.0
        %510 = vmatpush.msra.mxu0 0.0
        %511 = vmatpush.msra.mxu0 0.0
        %512 = vmatpush.msra.mxu0 0.0
        %513 = vmatpush.msra.mxu0 0.0
        %514 = vmatpush.msra.mxu0 0.0
        %515 = vmatpush.msra.mxu0 %v496
        %516 = vmatmul.f32.gmra.mxu0 %v494
        %v517 = vpop.f32.mrf.mxu0
        %v518 = vadd.f32 0.0, %v517
        %519 = vdwg.mxu0
        %520 = vmatpush.msra.mxu0 0.0
        %521 = vmatpush.msra.mxu0 0.0
        %522 = vmatpush.msra.mxu0 0.0
        %523 = vmatpush.msra.mxu0 0.0
        %524 = vmatpush.msra.mxu0 0.0
        %525 = vmatpush.msra.mxu0 0.0
        %526 = vmatpush.msra.mxu0 0.0
        %527 = vmatpush.msra.mxu0 0.0
        %528 = vmatpush.msra.mxu0 0.0
        %529 = vmatpush.msra.mxu0 0.0
        %530 = vmatpush.msra.mxu0 0.0
        %531 = vmatpush.msra.mxu0 0.0
        %532 = vmatpush.msra.mxu0 0.0
        %533 = vmatpush.msra.mxu0 0.0
        %534 = vmatpush.msra.mxu0 0.0
        %535 = vmatpush.msra.mxu0 %v498
        %536 = vmatmul.f32.gmra.mxu0 %v494
        %v537 = vpop.f32.mrf.mxu0
        %v538 = vadd.f32 0.0, %v537
        %539 = vdwg.mxu0
        %v541 = vsel %vm492, %v489, 0
        %v544 = vsel %vm373, %v487, 0
        %v547 = vsel %vm373, %v488, 0
        %549 = vmatpush.msra.mxu0 0.0
        %550 = vmatpush.msra.mxu0 0.0
        %551 = vmatpush.msra.mxu0 0.0
        %552 = vmatpush.msra.mxu0 0.0
        %553 = vmatpush.msra.mxu0 0.0
        %554 = vmatpush.msra.mxu0 0.0
        %555 = vmatpush.msra.mxu0 0.0
        %556 = vmatpush.msra.mxu0 0.0
        %557 = vmatpush.msra.mxu0 0.0
        %558 = vmatpush.msra.mxu0 0.0
        %559 = vmatpush.msra.mxu0 0.0
        %560 = vmatpush.msra.mxu0 0.0
        %561 = vmatpush.msra.mxu0 0.0
        %562 = vmatpush.msra.mxu0 0.0
        %563 = vmatpush.msra.mxu0 0.0
        %564 = vmatpush.msra.mxu0 %v544
        %565 = vmatmul.f32.gmra.mxu0 %v541
        %v566 = vpop.f32.mrf.mxu0
        %v567 = vadd.f32 %v518, %v566
        %568 = vdwg.mxu0
        %569 = vmatpush.msra.mxu0 0.0
        %570 = vmatpush.msra.mxu0 0.0
        %571 = vmatpush.msra.mxu0 0.0
        %572 = vmatpush.msra.mxu0 0.0
        %573 = vmatpush.msra.mxu0 0.0
        %574 = vmatpush.msra.mxu0 0.0
        %575 = vmatpush.msra.mxu0 0.0
        %576 = vmatpush.msra.mxu0 0.0
        %577 = vmatpush.msra.mxu0 0.0
        %578 = vmatpush.msra.mxu0 0.0
        %579 = vmatpush.msra.mxu0 0.0
        %580 = vmatpush.msra.mxu0 0.0
        %581 = vmatpush.msra.mxu0 0.0
        %582 = vmatpush.msra.mxu0 0.0
        %583 = vmatpush.msra.mxu0 0.0
        %584 = vmatpush.msra.mxu0 %v547
        %585 = vmatmul.f32.gmra.mxu0 %v541
        %v586 = vpop.f32.mrf.mxu0
        %v587 = vadd.f32 %v538, %v586
        %588 = vdwg.mxu0
        %v589 = vperm.slane %v269, 3
        %v590 = vperm.slane %v269, 7
        %v593 = vperm.slane %v589, 3
        %v594 = vperm.slane %v590, 3
        %v595 = vmul.f32 %v593, %v460
        %v596 = vmul.f32 %v594, %v457
        %v597 = vperm.slane %v437, 3
        %v598 = vperm.slane %v437, 7
        %v601 = vperm.slane %v597, 3
        %v602 = vperm.slane %v598, 3
        %v603 = vmul.f32 %v601, %v466
        %v604 = vmul.f32 %v602, %v470
        %v605 = vadd.f32 %v595, %v603
        %v606 = vadd.f32 %v596, %v604
        %s607 = scalar_lea.vmem %s3, 8
        %v608 = vld [vmem:[%s607] sm:$0xf]
        %v610 = vsel %vm492, %v608, 0
        %v613 = vsel %vm373, %v605, 0
        %v616 = vsel %vm373, %v606, 0
        %618 = vmatpush.msra.mxu0 0.0
        %619 = vmatpush.msra.mxu0 0.0
        %620 = vmatpush.msra.mxu0 0.0
        %621 = vmatpush.msra.mxu0 0.0
        %622 = vmatpush.msra.mxu0 0.0
        %623 = vmatpush.msra.mxu0 0.0
        %624 = vmatpush.msra.mxu0 0.0
        %625 = vmatpush.msra.mxu0 0.0
        %626 = vmatpush.msra.mxu0 0.0
        %627 = vmatpush.msra.mxu0 0.0
        %628 = vmatpush.msra.mxu0 0.0
        %629 = vmatpush.msra.mxu0 0.0
        %630 = vmatpush.msra.mxu0 0.0
        %631 = vmatpush.msra.mxu0 0.0
        %632 = vmatpush.msra.mxu0 0.0
        %633 = vmatpush.msra.mxu0 %v613
        %634 = vmatmul.f32.gmra.mxu0 %v610
        %v635 = vpop.f32.mrf.mxu0
        %v636 = vadd.f32 0.0, %v635
        %637 = vdwg.mxu0
        %638 = vmatpush.msra.mxu0 0.0
        %639 = vmatpush.msra.mxu0 0.0
        %640 = vmatpush.msra.mxu0 0.0
        %641 = vmatpush.msra.mxu0 0.0
        %642 = vmatpush.msra.mxu0 0.0
        %643 = vmatpush.msra.mxu0 0.0
        %644 = vmatpush.msra.mxu0 0.0
        %645 = vmatpush.msra.mxu0 0.0
        %646 = vmatpush.msra.mxu0 0.0
        %647 = vmatpush.msra.mxu0 0.0
        %648 = vmatpush.msra.mxu0 0.0
        %649 = vmatpush.msra.mxu0 0.0
        %650 = vmatpush.msra.mxu0 0.0
        %651 = vmatpush.msra.mxu0 0.0
        %652 = vmatpush.msra.mxu0 0.0
        %653 = vmatpush.msra.mxu0 %v616
        %654 = vmatmul.f32.gmra.mxu0 %v610
        %v655 = vpop.f32.mrf.mxu0
        %v656 = vadd.f32 0.0, %v655
        %657 = vdwg.mxu0
        %v658 = vadd.f32 %v567, %v636
        %v659 = vadd.f32 %v587, %v656
        %660 = vrot.lane.b32.xlu0 %v406, 1
        %v661 = vpop.permute.xlu0 %660
        %663 = vrot.lane.b32.xlu0 %v405, 1
        %v664 = vpop.permute.xlu0 %663
        %v665 = vsel %vm456, %v664, %v661
        %v668 = vsel %vm456, %v661, %v664
        %669 = vrot.lane.b32.xlu0 %v405, 127
        %v670 = vpop.permute.xlu0 %669
        %671 = vrot.lane.b32.xlu0 %v406, 127
        %v672 = vpop.permute.xlu0 %671
        %v673 = vsel %vm465, %v670, %v672
        %v677 = vsel %vm465, %v672, %v670
        %v678 = vmul.f32 %v475, %v673
        %v679 = vmul.f32 %v476, %v677
        %v680 = vmul.f32 %v483, %v668
        %v681 = vmul.f32 %v484, %v665
        %v682 = vadd.f32 %v678, %v680
        %v683 = vadd.f32 %v679, %v681
        %s684 = scalar_lea.vmem %s3, 12
        %v685 = vld [vmem:[%s684] sm:$0xf]
        %v687 = vsel %vm492, %v685, 0
        %v690 = vsel %vm373, %v682, 0
        %v693 = vsel %vm373, %v683, 0
        %695 = vmatpush.msra.mxu0 0.0
        %696 = vmatpush.msra.mxu0 0.0
        %697 = vmatpush.msra.mxu0 0.0
        %698 = vmatpush.msra.mxu0 0.0
        %699 = vmatpush.msra.mxu0 0.0
        %700 = vmatpush.msra.mxu0 0.0
        %701 = vmatpush.msra.mxu0 0.0
        %702 = vmatpush.msra.mxu0 0.0
        %703 = vmatpush.msra.mxu0 0.0
        %704 = vmatpush.msra.mxu0 0.0
        %705 = vmatpush.msra.mxu0 0.0
        %706 = vmatpush.msra.mxu0 0.0
        %707 = vmatpush.msra.mxu0 0.0
        %708 = vmatpush.msra.mxu0 0.0
        %709 = vmatpush.msra.mxu0 0.0
        %710 = vmatpush.msra.mxu0 %v690
        %711 = vmatmul.f32.gmra.mxu0 %v687
        %v712 = vpop.f32.mrf.mxu0
        %v713 = vadd.f32 0.0, %v712
        %714 = vdwg.mxu0
        %715 = vmatpush.msra.mxu0 0.0
        %716 = vmatpush.msra.mxu0 0.0
        %717 = vmatpush.msra.mxu0 0.0
        %718 = vmatpush.msra.mxu0 0.0
        %719 = vmatpush.msra.mxu0 0.0
        %720 = vmatpush.msra.mxu0 0.0
        %721 = vmatpush.msra.mxu0 0.0
        %722 = vmatpush.msra.mxu0 0.0
        %723 = vmatpush.msra.mxu0 0.0
        %724 = vmatpush.msra.mxu0 0.0
        %725 = vmatpush.msra.mxu0 0.0
        %726 = vmatpush.msra.mxu0 0.0
        %727 = vmatpush.msra.mxu0 0.0
        %728 = vmatpush.msra.mxu0 0.0
        %729 = vmatpush.msra.mxu0 0.0
        %730 = vmatpush.msra.mxu0 %v693
        %731 = vmatmul.f32.gmra.mxu0 %v687
        %v732 = vpop.f32.mrf.mxu0
        %v733 = vadd.f32 0.0, %v732
        %734 = vdwg.mxu0
        %v735 = vadd.f32 %v658, %v713
        %v736 = vadd.f32 %v659, %v733
        %s737 = scalar_lea.vmem %s3, 16
        %v738 = vld [vmem:[%s737] sm:$0xf]
        %v740 = vsel %vm492, %v738, 0
        %v742 = vsel %vm373, %v405, 0
        %v744 = vsel %vm373, %v406, 0
        %746 = vmatpush.msra.mxu0 0.0
        %747 = vmatpush.msra.mxu0 0.0
        %748 = vmatpush.msra.mxu0 0.0
        %749 = vmatpush.msra.mxu0 0.0
        %750 = vmatpush.msra.mxu0 0.0
        %751 = vmatpush.msra.mxu0 0.0
        %752 = vmatpush.msra.mxu0 0.0
        %753 = vmatpush.msra.mxu0 0.0
        %754 = vmatpush.msra.mxu0 0.0
        %755 = vmatpush.msra.mxu0 0.0
        %756 = vmatpush.msra.mxu0 0.0
        %757 = vmatpush.msra.mxu0 0.0
        %758 = vmatpush.msra.mxu0 0.0
        %759 = vmatpush.msra.mxu0 0.0
        %760 = vmatpush.msra.mxu0 0.0
        %761 = vmatpush.msra.mxu0 %v742
        %762 = vmatmul.f32.gmra.mxu0 %v740
        %v763 = vpop.f32.mrf.mxu0
        %v764 = vadd.f32 0.0, %v763
        %765 = vdwg.mxu0
        %766 = vmatpush.msra.mxu0 0.0
        %767 = vmatpush.msra.mxu0 0.0
        %768 = vmatpush.msra.mxu0 0.0
        %769 = vmatpush.msra.mxu0 0.0
        %770 = vmatpush.msra.mxu0 0.0
        %771 = vmatpush.msra.mxu0 0.0
        %772 = vmatpush.msra.mxu0 0.0
        %773 = vmatpush.msra.mxu0 0.0
        %774 = vmatpush.msra.mxu0 0.0
        %775 = vmatpush.msra.mxu0 0.0
        %776 = vmatpush.msra.mxu0 0.0
        %777 = vmatpush.msra.mxu0 0.0
        %778 = vmatpush.msra.mxu0 0.0
        %779 = vmatpush.msra.mxu0 0.0
        %780 = vmatpush.msra.mxu0 0.0
        %781 = vmatpush.msra.mxu0 %v744
        %782 = vmatmul.f32.gmra.mxu0 %v740
        %v783 = vpop.f32.mrf.mxu0
        %v784 = vadd.f32 0.0, %v783
        %785 = vdwg.mxu0
        %v786 = vadd.f32 %v735, %v764
        %v787 = vadd.f32 %v736, %v784
        %v788 = vmul.f32 %v593, %v668
        %v789 = vmul.f32 %v594, %v665
        %v790 = vmul.f32 %v601, %v673
        %v791 = vmul.f32 %v602, %v677
        %v792 = vadd.f32 %v788, %v790
        %v793 = vadd.f32 %v789, %v791
        %s794 = scalar_lea.vmem %s3, 20
        %v795 = vld [vmem:[%s794] sm:$0xf]
        %v797 = vsel %vm492, %v795, 0
        %v800 = vsel %vm373, %v792, 0
        %v803 = vsel %vm373, %v793, 0
        %805 = vmatpush.msra.mxu0 0.0
        %806 = vmatpush.msra.mxu0 0.0
        %807 = vmatpush.msra.mxu0 0.0
        %808 = vmatpush.msra.mxu0 0.0
        %809 = vmatpush.msra.mxu0 0.0
        %810 = vmatpush.msra.mxu0 0.0
        %811 = vmatpush.msra.mxu0 0.0
        %812 = vmatpush.msra.mxu0 0.0
        %813 = vmatpush.msra.mxu0 0.0
        %814 = vmatpush.msra.mxu0 0.0
        %815 = vmatpush.msra.mxu0 0.0
        %816 = vmatpush.msra.mxu0 0.0
        %817 = vmatpush.msra.mxu0 0.0
        %818 = vmatpush.msra.mxu0 0.0
        %819 = vmatpush.msra.mxu0 0.0
        %820 = vmatpush.msra.mxu0 %v800
        %821 = vmatmul.f32.gmra.mxu0 %v797
        %v822 = vpop.f32.mrf.mxu0
        %v823 = vadd.f32 0.0, %v822
        %824 = vdwg.mxu0
        %825 = vmatpush.msra.mxu0 0.0
        %826 = vmatpush.msra.mxu0 0.0
        %827 = vmatpush.msra.mxu0 0.0
        %828 = vmatpush.msra.mxu0 0.0
        %829 = vmatpush.msra.mxu0 0.0
        %830 = vmatpush.msra.mxu0 0.0
        %831 = vmatpush.msra.mxu0 0.0
        %832 = vmatpush.msra.mxu0 0.0
        %833 = vmatpush.msra.mxu0 0.0
        %834 = vmatpush.msra.mxu0 0.0
        %835 = vmatpush.msra.mxu0 0.0
        %836 = vmatpush.msra.mxu0 0.0
        %837 = vmatpush.msra.mxu0 0.0
        %838 = vmatpush.msra.mxu0 0.0
        %839 = vmatpush.msra.mxu0 0.0
        %840 = vmatpush.msra.mxu0 %v803
        %841 = vmatmul.f32.gmra.mxu0 %v797
        %v842 = vpop.f32.mrf.mxu0
        %v843 = vadd.f32 0.0, %v842
        %844 = vdwg.mxu0
        %v845 = vadd.f32 %v786, %v823
        %v846 = vadd.f32 %v787, %v843
        %v847 = vperm.slane %v269, 1
        %v848 = vperm.slane %v269, 5
        %v851 = vperm.slane %v847, 1
        %v852 = vperm.slane %v848, 1
        %v853 = vmul.f32 %v851, %v417
        %v854 = vmul.f32 %v852, %v414
        %v855 = vperm.slane %v437, 1
        %v856 = vperm.slane %v437, 5
        %v859 = vperm.slane %v855, 1
        %v860 = vperm.slane %v856, 1
        %v861 = vmul.f32 %v859, %v423
        %v862 = vmul.f32 %v860, %v427
        %v863 = vadd.f32 %v853, %v861
        %v864 = vadd.f32 %v854, %v862
        %866 = vrot.lane.b32.xlu0 %v864, 1
        %v867 = vpop.permute.xlu0 %866
        %870 = vrot.lane.b32.xlu0 %v863, 1
        %v871 = vpop.permute.xlu0 %870
        %v872 = vsel %vm456, %v871, %v867
        %v875 = vsel %vm456, %v867, %v871
        %876 = vrot.lane.b32.xlu0 %v863, 127
        %v877 = vpop.permute.xlu0 %876
        %878 = vrot.lane.b32.xlu0 %v864, 127
        %v879 = vpop.permute.xlu0 %878
        %v880 = vsel %vm465, %v877, %v879
        %v884 = vsel %vm465, %v879, %v877
        %v885 = vmul.f32 %v475, %v880
        %v886 = vmul.f32 %v476, %v884
        %v887 = vmul.f32 %v483, %v875
        %v888 = vmul.f32 %v484, %v872
        %v889 = vadd.f32 %v885, %v887
        %v890 = vadd.f32 %v886, %v888
        %s891 = scalar_lea.vmem %s3, 24
        %v892 = vld [vmem:[%s891] sm:$0xf]
        %v894 = vsel %vm492, %v892, 0
        %v897 = vsel %vm373, %v889, 0
        %v900 = vsel %vm373, %v890, 0
        %902 = vmatpush.msra.mxu0 0.0
        %903 = vmatpush.msra.mxu0 0.0
        %904 = vmatpush.msra.mxu0 0.0
        %905 = vmatpush.msra.mxu0 0.0
        %906 = vmatpush.msra.mxu0 0.0
        %907 = vmatpush.msra.mxu0 0.0
        %908 = vmatpush.msra.mxu0 0.0
        %909 = vmatpush.msra.mxu0 0.0
        %910 = vmatpush.msra.mxu0 0.0
        %911 = vmatpush.msra.mxu0 0.0
        %912 = vmatpush.msra.mxu0 0.0
        %913 = vmatpush.msra.mxu0 0.0
        %914 = vmatpush.msra.mxu0 0.0
        %915 = vmatpush.msra.mxu0 0.0
        %916 = vmatpush.msra.mxu0 0.0
        %917 = vmatpush.msra.mxu0 %v897
        %918 = vmatmul.f32.gmra.mxu0 %v894
        %v919 = vpop.f32.mrf.mxu0
        %v920 = vadd.f32 0.0, %v919
        %921 = vdwg.mxu0
        %922 = vmatpush.msra.mxu0 0.0
        %923 = vmatpush.msra.mxu0 0.0
        %924 = vmatpush.msra.mxu0 0.0
        %925 = vmatpush.msra.mxu0 0.0
        %926 = vmatpush.msra.mxu0 0.0
        %927 = vmatpush.msra.mxu0 0.0
        %928 = vmatpush.msra.mxu0 0.0
        %929 = vmatpush.msra.mxu0 0.0
        %930 = vmatpush.msra.mxu0 0.0
        %931 = vmatpush.msra.mxu0 0.0
        %932 = vmatpush.msra.mxu0 0.0
        %933 = vmatpush.msra.mxu0 0.0
        %934 = vmatpush.msra.mxu0 0.0
        %935 = vmatpush.msra.mxu0 0.0
        %936 = vmatpush.msra.mxu0 0.0
        %937 = vmatpush.msra.mxu0 %v900
        %938 = vmatmul.f32.gmra.mxu0 %v894
        %v939 = vpop.f32.mrf.mxu0
        %v940 = vadd.f32 0.0, %v939
        %941 = vdwg.mxu0
        %v942 = vadd.f32 %v845, %v920
        %v943 = vadd.f32 %v846, %v940
        %s944 = scalar_lea.vmem %s3, 28
        %v945 = vld [vmem:[%s944] sm:$0xf]
        %v947 = vsel %vm492, %v945, 0
        %v949 = vsel %vm373, %v863, 0
        %v951 = vsel %vm373, %v864, 0
        %953 = vmatpush.msra.mxu0 0.0
        %954 = vmatpush.msra.mxu0 0.0
        %955 = vmatpush.msra.mxu0 0.0
        %956 = vmatpush.msra.mxu0 0.0
        %957 = vmatpush.msra.mxu0 0.0
        %958 = vmatpush.msra.mxu0 0.0
        %959 = vmatpush.msra.mxu0 0.0
        %960 = vmatpush.msra.mxu0 0.0
        %961 = vmatpush.msra.mxu0 0.0
        %962 = vmatpush.msra.mxu0 0.0
        %963 = vmatpush.msra.mxu0 0.0
        %964 = vmatpush.msra.mxu0 0.0
        %965 = vmatpush.msra.mxu0 0.0
        %966 = vmatpush.msra.mxu0 0.0
        %967 = vmatpush.msra.mxu0 0.0
        %968 = vmatpush.msra.mxu0 %v949
        %969 = vmatmul.f32.gmra.mxu0 %v947
        %v970 = vpop.f32.mrf.mxu0
        %v971 = vadd.f32 0.0, %v970
        %972 = vdwg.mxu0
        %973 = vmatpush.msra.mxu0 0.0
        %974 = vmatpush.msra.mxu0 0.0
        %975 = vmatpush.msra.mxu0 0.0
        %976 = vmatpush.msra.mxu0 0.0
        %977 = vmatpush.msra.mxu0 0.0
        %978 = vmatpush.msra.mxu0 0.0
        %979 = vmatpush.msra.mxu0 0.0
        %980 = vmatpush.msra.mxu0 0.0
        %981 = vmatpush.msra.mxu0 0.0
        %982 = vmatpush.msra.mxu0 0.0
        %983 = vmatpush.msra.mxu0 0.0
        %984 = vmatpush.msra.mxu0 0.0
        %985 = vmatpush.msra.mxu0 0.0
        %986 = vmatpush.msra.mxu0 0.0
        %987 = vmatpush.msra.mxu0 0.0
        %988 = vmatpush.msra.mxu0 %v951
        %989 = vmatmul.f32.gmra.mxu0 %v947
        %v990 = vpop.f32.mrf.mxu0
        %v991 = vadd.f32 0.0, %v990
        %992 = vdwg.mxu0
        %v993 = vadd.f32 %v942, %v971
        %v994 = vadd.f32 %v943, %v991
        %v995 = vmul.f32 %v593, %v875
        %v996 = vmul.f32 %v594, %v872
        %v997 = vmul.f32 %v601, %v880
        %v998 = vmul.f32 %v602, %v884
        %v999 = vadd.f32 %v995, %v997
        %v1000 = vadd.f32 %v996, %v998
        %s1001 = scalar_lea.vmem %s3, 32
        %v1002 = vld [vmem:[%s1001] sm:$0xf]
        %v1004 = vsel %vm492, %v1002, 0
        %v1007 = vsel %vm373, %v999, 0
        %v1010 = vsel %vm373, %v1000, 0
        %1012 = vmatpush.msra.mxu0 0.0
        %1013 = vmatpush.msra.mxu0 0.0
        %1014 = vmatpush.msra.mxu0 0.0
        %1015 = vmatpush.msra.mxu0 0.0
        %1016 = vmatpush.msra.mxu0 0.0
        %1017 = vmatpush.msra.mxu0 0.0
        %1018 = vmatpush.msra.mxu0 0.0
        %1019 = vmatpush.msra.mxu0 0.0
        %1020 = vmatpush.msra.mxu0 0.0
        %1021 = vmatpush.msra.mxu0 0.0
        %1022 = vmatpush.msra.mxu0 0.0
        %1023 = vmatpush.msra.mxu0 0.0
        %1024 = vmatpush.msra.mxu0 0.0
        %1025 = vmatpush.msra.mxu0 0.0
        %1026 = vmatpush.msra.mxu0 0.0
        %1027 = vmatpush.msra.mxu0 %v1007
        %1028 = vmatmul.f32.gmra.mxu0 %v1004
        %v1029 = vpop.f32.mrf.mxu0
        %v1030 = vadd.f32 0.0, %v1029
        %1031 = vdwg.mxu0
        %1032 = vmatpush.msra.mxu0 0.0
        %1033 = vmatpush.msra.mxu0 0.0
        %1034 = vmatpush.msra.mxu0 0.0
        %1035 = vmatpush.msra.mxu0 0.0
        %1036 = vmatpush.msra.mxu0 0.0
        %1037 = vmatpush.msra.mxu0 0.0
        %1038 = vmatpush.msra.mxu0 0.0
        %1039 = vmatpush.msra.mxu0 0.0
        %1040 = vmatpush.msra.mxu0 0.0
        %1041 = vmatpush.msra.mxu0 0.0
        %1042 = vmatpush.msra.mxu0 0.0
        %1043 = vmatpush.msra.mxu0 0.0
        %1044 = vmatpush.msra.mxu0 0.0
        %1045 = vmatpush.msra.mxu0 0.0
        %1046 = vmatpush.msra.mxu0 0.0
        %1047 = vmatpush.msra.mxu0 %v1010
        %1048 = vmatmul.f32.gmra.mxu0 %v1004
        %v1049 = vpop.f32.mrf.mxu0
        %v1050 = vadd.f32 0.0, %v1049
        %1051 = vdwg.mxu0
        %v1052 = vadd.f32 %v993, %v1030
        %v1053 = vadd.f32 %v994, %v1050
        %v1054 = vsel %vm373, %v1052, 0.0
        %v1055 = vsel %vm373, %v1053, 0.0
        %v1056 = vadd.f32 %v1054, %v1055
        %1057 = vadd.xlane.f32.xlu0 %v1056
        %v1058 = vpop.xlane.xlu0 %1057
        %v1059 = vmul.f32 %v1052, %v1052
        %v1060 = vmul.f32 %v1053, %v1053
        %v1061 = vsel %vm373, %v1059, 0.0
        %v1062 = vsel %vm373, %v1060, 0.0
        %v1063 = vadd.f32 %v1061, %v1062
        %1064 = vadd.xlane.f32.xlu0 %v1063
        %v1065 = vpop.xlane.xlu0 %1064
        %v1066 = vmul.f32 %v1058, 0.00390625
        %v1067 = vmul.f32 %v1065, 0.00390625
        %v1068 = vmul.f32 %v1066, %v1066
        %v1069 = vsub.f32 %v1067, %v1068
        %v1070 = vsub.f32 %v1052, %v1066
        %v1071 = vsub.f32 %v1053, %v1066
        %v1072 = vadd.f32 %v1069, 1e-05
        %v1073 = vrsqrt.pop %v1072
        %v1074 = vmul.f32 %v1073, %v1072
        %v1075 = vmul.f32 %v1074, %v1073
        %v1076 = vmul.f32 0.5, %v1075
        %v1077 = vsub.f32 1.5, %v1076
        %v1078 = vmul.f32 %v1073, %v1077
        %vm1079 = vweird.f32 %v1072
        %vm1080 = vweird.f32 %v1073
        %vm1081 = vmor %vm1079, %vm1080
        %v1082 = vsel %vm1081, %v1073, %v1078
        %v1083 = vmul.f32 %v1070, %v1082
        %v1084 = vmul.f32 %v1071, %v1082
        %v1085 = vmax.f32 %v1083, 0.0
        %v1086 = vmax.f32 %v1084, 0.0
        %v1087 = vld [vmem:[%s4] sm:$0xff]
        %v1088 = vld [vmem:[%s4 + $0x8] sm:$0xff]
        %v1089 = vld [vmem:[%s5] sm:$0xff]
        %v1090 = vld [vmem:[%s5 + $0x8] sm:$0xff]
        %1092 = vset.pattern.permute.xlu0 0
        %1093 = vperm.xlu0 %1092, %v1089
        %v1094 = vpop.permute.xlu0 %1093
        %1097 = vset.pattern.permute.xlu0 0
        %1098 = vperm.xlu0 %1097, %v1090
        %v1099 = vpop.permute.xlu0 %1098
        %v1102 = vsel %vm492, %v1087, 0
        %v1105 = vsel %vm492, %v1088, 0
        %v1108 = vsel %vm373, %v1085, 0
        %v1111 = vsel %vm373, %v1086, 0
        %1113 = vmatpush.msra.mxu0 0.0
        %1114 = vmatpush.msra.mxu0 0.0
        %1115 = vmatpush.msra.mxu0 0.0
        %1116 = vmatpush.msra.mxu0 0.0
        %1117 = vmatpush.msra.mxu0 0.0
        %1118 = vmatpush.msra.mxu0 0.0
        %1119 = vmatpush.msra.mxu0 0.0
        %1120 = vmatpush.msra.mxu0 0.0
        %1121 = vmatpush.msra.mxu0 0.0
        %1122 = vmatpush.msra.mxu0 0.0
        %1123 = vmatpush.msra.mxu0 0.0
        %1124 = vmatpush.msra.mxu0 0.0
        %1125 = vmatpush.msra.mxu0 0.0
        %1126 = vmatpush.msra.mxu0 0.0
        %1127 = vmatpush.msra.mxu0 0.0
        %1128 = vmatpush.msra.mxu0 %v1108
        %1129 = vmatmul.f32.gmra.mxu0 %v1102
        %v1130 = vpop.f32.mrf.mxu0
        %v1131 = vadd.f32 %v1094, %v1130
        %1132 = vmatmul.f32.gmra.mxu0 %v1105
        %v1133 = vpop.f32.mrf.mxu0
        %v1134 = vadd.f32 %v1099, %v1133
        %1135 = vdwg.mxu0
        %1136 = vmatpush.msra.mxu0 0.0
        %1137 = vmatpush.msra.mxu0 0.0
        %1138 = vmatpush.msra.mxu0 0.0
        %1139 = vmatpush.msra.mxu0 0.0
        %1140 = vmatpush.msra.mxu0 0.0
        %1141 = vmatpush.msra.mxu0 0.0
        %1142 = vmatpush.msra.mxu0 0.0
        %1143 = vmatpush.msra.mxu0 0.0
        %1144 = vmatpush.msra.mxu0 0.0
        %1145 = vmatpush.msra.mxu0 0.0
        %1146 = vmatpush.msra.mxu0 0.0
        %1147 = vmatpush.msra.mxu0 0.0
        %1148 = vmatpush.msra.mxu0 0.0
        %1149 = vmatpush.msra.mxu0 0.0
        %1150 = vmatpush.msra.mxu0 0.0
        %1151 = vmatpush.msra.mxu0 %v1111
        %1152 = vmatmul.f32.gmra.mxu0 %v1102
        %v1153 = vpop.f32.mrf.mxu0
        %v1154 = vadd.f32 %v1094, %v1153
        %1155 = vmatmul.f32.gmra.mxu0 %v1105
        %v1156 = vpop.f32.mrf.mxu0
        %v1157 = vadd.f32 %v1099, %v1156
        %1158 = vdwg.mxu0
        %v1159 = vadd.f32 %v1131, %v265
        %v1160 = vadd.f32 %v1154, %v266
        %v1161 = vadd.f32 %v1134, %v267
        %v1162 = vadd.f32 %v1157, %v268
        %1163 = vst [vmem:[%s259] sm:$0xff] %v1159
        %1164 = vst [vmem:[%s259 + $0x8] sm:$0xff] %v1160
        %1165 = vst [vmem:[%s259 + $0x10] sm:$0xff] %v1161
        %1166 = vst [vmem:[%s259 + $0x18] sm:$0xff] %v1162
        %s1167 = sand.u32 %s160, 1
        %s1168 = scalar_lea.sflag [#allocation4], %s1167
        %s1169 = sand.u32 %s160, 1
        %s1170 = smul.addr %s1169, 32
        %s1171 = scalar_lea.vmem [#allocation5], %s1170
        // Predicated region
        $region49: #{tpu_custom_call.1} parent=43 // pred_check
          %p1172 = pneg %p170
        $region50: #{tpu_custom_call.1} parent=43 // pred_check_branch
          %1174 = sbr.rel (%p1172) target = $region52
        $region51: #{tpu_custom_call.1} parent=43 // pred_region
          %1176 = vsyncadd %s1168, 0
          %s1177 = smul.addr %s21, 4
          %s1178 = smul.addr %s1177, 8
          %s1179 = scalar_lea.hbm %s6, %s1178
          %s1180 = sshll.u32 %s1171, 4
          %s1181 = int_to_ptr.vmem [resolvable:$true] %s1180
          %s1182 = sshll.u32 %s1179, 4
          %s1183 = int_to_ptr.hbm [resolvable:$true] %s1182
          %1188 = dma.vmem_to_hbm [thread:$0]  %s1181, 512, %s1183, %s1168, 256, 256, 16
        $region52: #{tpu_custom_call.1} parent=43 // pred_fallthru
          _
      $region44: #{tpu_custom_call.1} parent=5 // pred_fallthru
        _
      %p1189 = scmp.le.s32.totalorder 2, %s16
      // Predicated region
      $region53: #{tpu_custom_call.1} parent=5 // pred_check
        %p1190 = pneg %p1189
      $region54: #{tpu_custom_call.1} parent=5 // pred_check_branch
        %1192 = sbr.rel (%p1190) target = $region56
      $region55: #{tpu_custom_call.1} parent=5 // pred_region
        %s1193 = ssub.s32 %s16, 2
        // Predicated region
        $region57: #{tpu_custom_call.1} parent=55 // pred_check
          %p1194 = pneg %p176
        $region58: #{tpu_custom_call.1} parent=55 // pred_check_branch
          %1196 = sbr.rel (%p1194) target = $region60
        $region59: #{tpu_custom_call.1} parent=55 // pred_region
          %s1197 = sand.u32 %s161, 1
          %s1198 = scalar_lea.sflag [#allocation4], %s1197
          %s1199 = sand.u32 %s161, 1
          %s1200 = smul.addr %s1199, 32
          %s1201 = scalar_lea.vmem [#allocation5], %s1200
          %1203 = dma.done %s1198, 512
        $region60: #{tpu_custom_call.1} parent=55 // pred_fallthru
          _
      $region56: #{tpu_custom_call.1} parent=5 // pred_fallthru
        _
    $region6: #{tpu_custom_call.1} parent=1 // loop_footer
      %s20 = sadd.s32 1, %s16
    $region7: #{tpu_custom_call.1} parent=1 // loop_footer_branch
      %15 = sbr.rel target = $region3
    $region8: #{tpu_custom_call.1} parent=1 // loop_exit
      _
    %1204 = vsyncpa [#allocation3], 1
    %s1205 = scalar_lea.sflag [#allocation3], 1
    %1206 = vsyncpa %s1205, 1
    %1207 = vsyncpa [#allocation4], 1
    %s1208 = scalar_lea.sflag [#allocation4], 1
    %1209 = vsyncpa %s1208, 1

</llo_original>
